<compile_context>
chip_gen: v6e
topology: v6e:2x2x1
jax: 0.10.0
libtpu: 0.0.40
codegen_flags: <defaults>
</compile_context>

<pallas_src>
import numpy as np
import jax
import jax.numpy as jnp
from jax.experimental import pallas as pl
from jax.experimental.pallas import tpu as pltpu

THRESHOLD = 10.0
PI_APPROX = 3.14159            # the torch module uses 180.0 / 3.14159

# scipy.signal.windows.gaussian(5, std=1.0) taps (no normalization) -- plain
# python floats baked into the kernel, nothing is uploaded per call.
_G = tuple(float(v) for v in np.exp(-0.5 * (np.arange(5, dtype=np.float64) - 2.0) ** 2))
# squared cosine of the orientation-bin boundaries (m + 0.5) * 3.14159 / 4
_COS = tuple(float(np.cos((m + 0.5) * PI_APPROX / 4.0)) for m in range(4))
_COS_SQ = tuple(c * c for c in _COS)

# Interior offset of the zero-padded scratch tile (tile-aligned so the interior
# store is cheap) and the 2-wide far-side zero margin.
_PT, _PL, _PB = 8, 128, 2

# Neighbour (row, col) offset subtracted by directional filter d = 0..7
# (0, 45, 90, ..., 315 deg; torch Conv2d cross-correlation convention).
_DIR_OFFS = ((0, 1), (1, 1), (1, 0), (1, -1),
             (0, -1), (-1, -1), (-1, 0), (-1, 1))


def _make_kernel(H, W):
    g0, g1, g2, g3, g4 = _G
    c0s, c1s, c2s, c3s = _COS_SQ
    SH, SW = H + _PT + _PB, W + _PL + _PB   # zero-padded scratch extent

    def kernel(img_ref, blur_ref, mag_ref, ori_ref, thin_ref, thr_ref,
               early_ref, pad_ref):
        # Zero the scratch once; only the interior is ever overwritten, so the
        # border stays zero and provides Conv2d's zero padding for free.
        pad_ref[...] = jnp.zeros((SH, SW), jnp.float32)

        def put(val):                       # write the (H, W) interior
            pad_ref[pl.ds(_PT, H), pl.ds(_PL, W)] = val

        def win(di, dj):                    # read the interior shifted by (di, dj)
            return pad_ref[pl.ds(_PT + di, H), pl.ds(_PL + dj, W)]

        gx_list, gy_list, mag_list = [], [], []
        for ch in range(3):
            # separable 5-tap gaussian: 1x5 horizontal then 5x1 vertical
            put(img_ref[ch])
            hblur = (g0 * win(0, -2) + g1 * win(0, -1) + g2 * win(0, 0)
                     + g3 * win(0, 1) + g4 * win(0, 2))
            put(hblur)
            blur = (g0 * win(-2, 0) + g1 * win(-1, 0) + g2 * win(0, 0)
                    + g3 * win(1, 0) + g4 * win(2, 0))
            blur_ref[ch] = blur

            # 3x3 sobel (horizontal + vertical) from the 8 neighbours of blur
            put(blur)
            nw, nn, ne = win(-1, -1), win(-1, 0), win(-1, 1)
            ww, ee = win(0, -1), win(0, 1)
            sw, ss, se = win(1, -1), win(1, 0), win(1, 1)
            gx = (nw + 2.0 * ww + sw) - (ne + 2.0 * ee + se)
            gy = (nw + 2.0 * nn + ne) - (sw + 2.0 * ss + se)
            gx_list.append(gx)
            gy_list.append(gy)
            mag_list.append(jnp.sqrt(gx * gx + gy * gy))

        grad_mag = mag_list[0] + mag_list[1] + mag_list[2]
        gx_s = gx_list[0] + gx_list[1] + gx_list[2]
        gy_s = gy_list[0] + gy_list[1] + gy_list[2]

        mag_ref[...] = grad_mag
        early_ref[...] = jnp.where(grad_mag < THRESHOLD, 0.0, grad_mag)

        # Orientation bin k = round(atan2(gy, gx) * 4 / 3.14159) in [-4, 4],
        # via squared comparisons (no atan2, no extra sqrt):
        #   |angle| > (m+0.5)*pi/4   <=>   gx < r * cos((m+0.5)*pi/4)
        gx2 = gx_s * gx_s
        r2 = gx2 + gy_s * gy_s
        xneg = gx_s < 0.0
        b0 = jnp.logical_or(xneg, gx2 < r2 * c0s)      # cos > 0 boundaries
        b1 = jnp.logical_or(xneg, gx2 < r2 * c1s)
        b2 = jnp.logical_and(xneg, gx2 > r2 * c2s)     # cos < 0 boundaries
        b3 = jnp.logical_and(xneg, gx2 > r2 * c3s)
        cnt = (b0.astype(jnp.int32) + b1.astype(jnp.int32)
               + b2.astype(jnp.int32) + b3.astype(jnp.int32))
        k = jnp.where(gy_s >= 0.0, cnt, -cnt)

        ori_ref[...] = (k + 4).astype(jnp.float32) * 45.0
        idx_pos = jnp.where(k == 4, 0, k + 4)          # (k + 4) % 8
        idx_neg = jnp.where(k < 0, k + 8, k)           # (k + 8) % 8

        # Each directional filter is grad_mag minus one neighbour; gather only
        # the per-pixel selected neighbour for the non-max suppression.
        put(grad_mag)
        nbr_pos = jnp.zeros_like(grad_mag)
        nbr_neg = jnp.zeros_like(grad_mag)
        for d, (di, dj) in enumerate(_DIR_OFFS):
            nb = win(di, dj)
            nbr_pos = jnp.where(idx_pos == d, nb, nbr_pos)
            nbr_neg = jnp.where(idx_neg == d, nb, nbr_neg)

        is_max = jnp.minimum(grad_mag - nbr_pos, grad_mag - nbr_neg) > 0.0
        thin = jnp.where(is_max, grad_mag, 0.0)
        thin_ref[...] = thin
        thr_ref[...] = jnp.where(thin < THRESHOLD, 0.0, thin)

    return kernel, (SH, SW)


def canny_net_forward(img):
    """img: (1, 3, H, W) float32 NCHW (batch must be 1, like the torch module)."""
    assert img.shape[0] == 1 and img.shape[1] == 3
    _, _, H, W = img.shape
    kernel, scratch_shape = _make_kernel(H, W)

    out_shape = [
        jax.ShapeDtypeStruct((3, H, W), jnp.float32),  # blurred_img
        jax.ShapeDtypeStruct((H, W), jnp.float32),     # grad_mag
        jax.ShapeDtypeStruct((H, W), jnp.float32),     # grad_orientation
        jax.ShapeDtypeStruct((H, W), jnp.float32),     # thin_edges
        jax.ShapeDtypeStruct((H, W), jnp.float32),     # thresholded
        jax.ShapeDtypeStruct((H, W), jnp.float32),     # early_threshold
    ]

    # TODO(synk): for very large images, tile the grid over rows with a 4-row
    # halo (manual DMA) so the working set stays inside v7x's 64 MiB VMEM and
    # both TensorCores split the rows; with the O(W^2) constants gone, a single
    # full-image block is fine for small/medium H*W.
    fn = pl.pallas_call(
        kernel,
        out_shape=out_shape,
        grid_spec=pltpu.PrefetchScalarGridSpec(
            num_scalar_prefetch=0,
            grid=(1,),
            in_specs=[pl.BlockSpec((3, H, W), lambda i: (0, 0, 0))],
            out_specs=[pl.BlockSpec((3, H, W), lambda i: (0, 0, 0))]
            + [pl.BlockSpec((H, W), lambda i: (0, 0))] * 5,
            scratch_shapes=[pltpu.VMEM(scratch_shape, jnp.float32)],
        ),
        compiler_params=pltpu.CompilerParams(
            dimension_semantics=("arbitrary",)),
    )

    blurred, mag, ori, thin, thr, early = fn(img[0].astype(jnp.float32))

    # restore the PyTorch output shapes
    return (blurred[None],        # (1, 3, H, W)
            mag[None, None],      # (1, 1, H, W)
            ori[None, None],
            thin[None, None],
            thr[None, None],
            early[None, None])


if __name__ == "__main__":
    key = jax.random.PRNGKey(0)
    H = W = 16
    # image-like values in [0, 255)
    img = jax.random.uniform(key, (1, 3, H, W), dtype=jnp.float32) * 255.0

    fwd = jax.jit(canny_net_forward)
    outs = jax.block_until_ready(fwd(img))

    blurred, grad_mag, grad_ori, thin_edges, thresholded, early = outs
    assert blurred.shape == (1, 3, H, W)
    assert grad_mag.shape == grad_ori.shape == thin_edges.shape \
        == thresholded.shape == early.shape == (1, 1, H, W)
    assert bool(jnp.all(jnp.isfinite(grad_mag)))
    print("KERNEL_OK")
</pallas_src>

<mosaic_0001>
module attributes {stable_mosaic.version = 11 : i64} {
  func.func @kernel(%arg0: i32, %arg1: memref<3x16x16xf32, #tpu.memory_space<vmem>>, %arg2: memref<3x16x16xf32, #tpu.memory_space<vmem>>, %arg3: memref<16x16xf32, #tpu.memory_space<vmem>>, %arg4: memref<16x16xf32, #tpu.memory_space<vmem>>, %arg5: memref<16x16xf32, #tpu.memory_space<vmem>>, %arg6: memref<16x16xf32, #tpu.memory_space<vmem>>, %arg7: memref<16x16xf32, #tpu.memory_space<vmem>>, %arg8: memref<26x146xf32, #tpu.memory_space<vmem>>) attributes {dimension_semantics = [#tpu.dimension_semantics<arbitrary>], iteration_bounds = array<i64: 1>, scalar_prefetch = 0 : i64, scratch_operands = 1 : i64, tpu.core_type = #tpu.core_type<tc>, window_params = [{pipeline_mode = #tpu.pipeline_mode<synchronous>, transform_indices = @transform_0, window_bounds = array<i64: 3, 16, 16>}, {pipeline_mode = #tpu.pipeline_mode<synchronous>, transform_indices = @transform_1, window_bounds = array<i64: 3, 16, 16>}, {pipeline_mode = #tpu.pipeline_mode<synchronous>, transform_indices = @transform_2, window_bounds = array<i64: 16, 16>}, {pipeline_mode = #tpu.pipeline_mode<synchronous>, transform_indices = @transform_3, window_bounds = array<i64: 16, 16>}, {pipeline_mode = #tpu.pipeline_mode<synchronous>, transform_indices = @transform_4, window_bounds = array<i64: 16, 16>}, {pipeline_mode = #tpu.pipeline_mode<synchronous>, transform_indices = @transform_5, window_bounds = array<i64: 16, 16>}, {pipeline_mode = #tpu.pipeline_mode<synchronous>, transform_indices = @transform_6, window_bounds = array<i64: 16, 16>}]} {
    %cst = arith.constant 0.000000e+00 : f32
    %0 = vector.broadcast %cst : f32 to vector<26x146xf32>
    %c0 = arith.constant 0 : index
    %c0_0 = arith.constant 0 : index
    %1 = vector.load %arg8[%c0, %c0_0] : memref<26x146xf32, #tpu.memory_space<vmem>>, vector<26x146xf32>
    tpu.vector_store %arg8[%c0, %c0_0], %0 {strides = array<i32>} : memref<26x146xf32, #tpu.memory_space<vmem>>, vector<26x146xf32>,
    %c0_1 = arith.constant 0 : index
    %c0_2 = arith.constant 0 : index
    %c0_3 = arith.constant 0 : index
    %2 = vector.load %arg1[%c0_1, %c0_2, %c0_3] : memref<3x16x16xf32, #tpu.memory_space<vmem>>, vector<1x16x16xf32>
    %3 = vector.shape_cast %2 : vector<1x16x16xf32> to vector<16x16xf32>
    %c8 = arith.constant 8 : index
    %c128 = arith.constant 128 : index
    %4 = vector.load %arg8[%c8, %c128] : memref<26x146xf32, #tpu.memory_space<vmem>>, vector<16x16xf32>
    tpu.vector_store %arg8[%c8, %c128], %3 {strides = array<i32>} : memref<26x146xf32, #tpu.memory_space<vmem>>, vector<16x16xf32>,
    %c8_4 = arith.constant 8 : index
    %c126 = arith.constant 126 : index
    %5 = vector.load %arg8[%c8_4, %c126] : memref<26x146xf32, #tpu.memory_space<vmem>>, vector<16x16xf32>
    %cst_5 = arith.constant 0.135335281 : f32
    %6 = vector.broadcast %cst_5 : f32 to vector<16x16xf32>
    %7 = arith.mulf %6, %5 : vector<16x16xf32>
    %c8_6 = arith.constant 8 : index
    %c127 = arith.constant 127 : index
    %8 = vector.load %arg8[%c8_6, %c127] : memref<26x146xf32, #tpu.memory_space<vmem>>, vector<16x16xf32>
    %cst_7 = arith.constant 0.606530666 : f32
    %9 = vector.broadcast %cst_7 : f32 to vector<16x16xf32>
    %10 = arith.mulf %9, %8 : vector<16x16xf32>
    %11 = arith.addf %7, %10 : vector<16x16xf32>
    %c8_8 = arith.constant 8 : index
    %c128_9 = arith.constant 128 : index
    %12 = vector.load %arg8[%c8_8, %c128_9] : memref<26x146xf32, #tpu.memory_space<vmem>>, vector<16x16xf32>
    %cst_10 = arith.constant 1.000000e+00 : f32
    %13 = vector.broadcast %cst_10 : f32 to vector<16x16xf32>
    %14 = arith.mulf %13, %12 : vector<16x16xf32>
    %15 = arith.addf %11, %14 : vector<16x16xf32>
    %c8_11 = arith.constant 8 : index
    %c129 = arith.constant 129 : index
    %16 = vector.load %arg8[%c8_11, %c129] : memref<26x146xf32, #tpu.memory_space<vmem>>, vector<16x16xf32>
    %cst_12 = arith.constant 0.606530666 : f32
    %17 = vector.broadcast %cst_12 : f32 to vector<16x16xf32>
    %18 = arith.mulf %17, %16 : vector<16x16xf32>
    %19 = arith.addf %15, %18 : vector<16x16xf32>
    %c8_13 = arith.constant 8 : index
    %c130 = arith.constant 130 : index
    %20 = vector.load %arg8[%c8_13, %c130] : memref<26x146xf32, #tpu.memory_space<vmem>>, vector<16x16xf32>
    %cst_14 = arith.constant 0.135335281 : f32
    %21 = vector.broadcast %cst_14 : f32 to vector<16x16xf32>
    %22 = arith.mulf %21, %20 : vector<16x16xf32>
    %23 = arith.addf %19, %22 : vector<16x16xf32>
    %c8_15 = arith.constant 8 : index
    %c128_16 = arith.constant 128 : index
    %24 = vector.load %arg8[%c8_15, %c128_16] : memref<26x146xf32, #tpu.memory_space<vmem>>, vector<16x16xf32>
    tpu.vector_store %arg8[%c8_15, %c128_16], %23 {strides = array<i32>} : memref<26x146xf32, #tpu.memory_space<vmem>>, vector<16x16xf32>,
    %c6 = arith.constant 6 : index
    %c128_17 = arith.constant 128 : index
    %25 = vector.load %arg8[%c6, %c128_17] : memref<26x146xf32, #tpu.memory_space<vmem>>, vector<16x16xf32>
    %cst_18 = arith.constant 0.135335281 : f32
    %26 = vector.broadcast %cst_18 : f32 to vector<16x16xf32>
    %27 = arith.mulf %26, %25 : vector<16x16xf32>
    %c7 = arith.constant 7 : index
    %c128_19 = arith.constant 128 : index
    %28 = vector.load %arg8[%c7, %c128_19] : memref<26x146xf32, #tpu.memory_space<vmem>>, vector<16x16xf32>
    %cst_20 = arith.constant 0.606530666 : f32
    %29 = vector.broadcast %cst_20 : f32 to vector<16x16xf32>
    %30 = arith.mulf %29, %28 : vector<16x16xf32>
    %31 = arith.addf %27, %30 : vector<16x16xf32>
    %c8_21 = arith.constant 8 : index
    %c128_22 = arith.constant 128 : index
    %32 = vector.load %arg8[%c8_21, %c128_22] : memref<26x146xf32, #tpu.memory_space<vmem>>, vector<16x16xf32>
    %cst_23 = arith.constant 1.000000e+00 : f32
    %33 = vector.broadcast %cst_23 : f32 to vector<16x16xf32>
    %34 = arith.mulf %33, %32 : vector<16x16xf32>
    %35 = arith.addf %31, %34 : vector<16x16xf32>
    %c9 = arith.constant 9 : index
    %c128_24 = arith.constant 128 : index
    %36 = vector.load %arg8[%c9, %c128_24] : memref<26x146xf32, #tpu.memory_space<vmem>>, vector<16x16xf32>
    %cst_25 = arith.constant 0.606530666 : f32
    %37 = vector.broadcast %cst_25 : f32 to vector<16x16xf32>
    %38 = arith.mulf %37, %36 : vector<16x16xf32>
    %39 = arith.addf %35, %38 : vector<16x16xf32>
    %c10 = arith.constant 10 : index
    %c128_26 = arith.constant 128 : index
    %40 = vector.load %arg8[%c10, %c128_26] : memref<26x146xf32, #tpu.memory_space<vmem>>, vector<16x16xf32>
    %cst_27 = arith.constant 0.135335281 : f32
    %41 = vector.broadcast %cst_27 : f32 to vector<16x16xf32>
    %42 = arith.mulf %41, %40 : vector<16x16xf32>
    %43 = arith.addf %39, %42 : vector<16x16xf32>
    %c0_28 = arith.constant 0 : index
    %c0_29 = arith.constant 0 : index
    %c0_30 = arith.constant 0 : index
    %44 = vector.load %arg2[%c0_28, %c0_29, %c0_30] : memref<3x16x16xf32, #tpu.memory_space<vmem>>, vector<1x16x16xf32>
    %45 = vector.shape_cast %44 : vector<1x16x16xf32> to vector<16x16xf32>
    %46 = vector.shape_cast %43 : vector<16x16xf32> to vector<1x16x16xf32>
    tpu.vector_store %arg2[%c0_28, %c0_29, %c0_30], %46 {strides = array<i32>} : memref<3x16x16xf32, #tpu.memory_space<vmem>>, vector<1x16x16xf32>,
    %c8_31 = arith.constant 8 : index
    %c128_32 = arith.constant 128 : index
    %47 = vector.load %arg8[%c8_31, %c128_32] : memref<26x146xf32, #tpu.memory_space<vmem>>, vector<16x16xf32>
    tpu.vector_store %arg8[%c8_31, %c128_32], %43 {strides = array<i32>} : memref<26x146xf32, #tpu.memory_space<vmem>>, vector<16x16xf32>,
    %c7_33 = arith.constant 7 : index
    %c127_34 = arith.constant 127 : index
    %48 = vector.load %arg8[%c7_33, %c127_34] : memref<26x146xf32, #tpu.memory_space<vmem>>, vector<16x16xf32>
    %c7_35 = arith.constant 7 : index
    %c128_36 = arith.constant 128 : index
    %49 = vector.load %arg8[%c7_35, %c128_36] : memref<26x146xf32, #tpu.memory_space<vmem>>, vector<16x16xf32>
    %c7_37 = arith.constant 7 : index
    %c129_38 = arith.constant 129 : index
    %50 = vector.load %arg8[%c7_37, %c129_38] : memref<26x146xf32, #tpu.memory_space<vmem>>, vector<16x16xf32>
    %c8_39 = arith.constant 8 : index
    %c127_40 = arith.constant 127 : index
    %51 = vector.load %arg8[%c8_39, %c127_40] : memref<26x146xf32, #tpu.memory_space<vmem>>, vector<16x16xf32>
    %c8_41 = arith.constant 8 : index
    %c129_42 = arith.constant 129 : index
    %52 = vector.load %arg8[%c8_41, %c129_42] : memref<26x146xf32, #tpu.memory_space<vmem>>, vector<16x16xf32>
    %c9_43 = arith.constant 9 : index
    %c127_44 = arith.constant 127 : index
    %53 = vector.load %arg8[%c9_43, %c127_44] : memref<26x146xf32, #tpu.memory_space<vmem>>, vector<16x16xf32>
    %c9_45 = arith.constant 9 : index
    %c128_46 = arith.constant 128 : index
    %54 = vector.load %arg8[%c9_45, %c128_46] : memref<26x146xf32, #tpu.memory_space<vmem>>, vector<16x16xf32>
    %c9_47 = arith.constant 9 : index
    %c129_48 = arith.constant 129 : index
    %55 = vector.load %arg8[%c9_47, %c129_48] : memref<26x146xf32, #tpu.memory_space<vmem>>, vector<16x16xf32>
    %cst_49 = arith.constant 2.000000e+00 : f32
    %56 = vector.broadcast %cst_49 : f32 to vector<16x16xf32>
    %57 = arith.mulf %56, %51 : vector<16x16xf32>
    %58 = arith.addf %48, %57 : vector<16x16xf32>
    %59 = arith.addf %58, %53 : vector<16x16xf32>
    %cst_50 = arith.constant 2.000000e+00 : f32
    %60 = vector.broadcast %cst_50 : f32 to vector<16x16xf32>
    %61 = arith.mulf %60, %52 : vector<16x16xf32>
    %62 = arith.addf %50, %61 : vector<16x16xf32>
    %63 = arith.addf %62, %55 : vector<16x16xf32>
    %64 = arith.subf %59, %63 : vector<16x16xf32>
    %cst_51 = arith.constant 2.000000e+00 : f32
    %65 = vector.broadcast %cst_51 : f32 to vector<16x16xf32>
    %66 = arith.mulf %65, %49 : vector<16x16xf32>
    %67 = arith.addf %48, %66 : vector<16x16xf32>
    %68 = arith.addf %67, %50 : vector<16x16xf32>
    %cst_52 = arith.constant 2.000000e+00 : f32
    %69 = vector.broadcast %cst_52 : f32 to vector<16x16xf32>
    %70 = arith.mulf %69, %54 : vector<16x16xf32>
    %71 = arith.addf %53, %70 : vector<16x16xf32>
    %72 = arith.addf %71, %55 : vector<16x16xf32>
    %73 = arith.subf %68, %72 : vector<16x16xf32>
    %74 = arith.mulf %64, %64 : vector<16x16xf32>
    %75 = arith.mulf %73, %73 : vector<16x16xf32>
    %76 = arith.addf %74, %75 : vector<16x16xf32>
    %77 = math.sqrt %76 : vector<16x16xf32>
    %c1 = arith.constant 1 : index
    %c0_53 = arith.constant 0 : index
    %c0_54 = arith.constant 0 : index
    %78 = vector.load %arg1[%c1, %c0_53, %c0_54] : memref<3x16x16xf32, #tpu.memory_space<vmem>>, vector<1x16x16xf32>
    %79 = vector.shape_cast %78 : vector<1x16x16xf32> to vector<16x16xf32>
    %c8_55 = arith.constant 8 : index
    %c128_56 = arith.constant 128 : index
    %80 = vector.load %arg8[%c8_55, %c128_56] : memref<26x146xf32, #tpu.memory_space<vmem>>, vector<16x16xf32>
    tpu.vector_store %arg8[%c8_55, %c128_56], %79 {strides = array<i32>} : memref<26x146xf32, #tpu.memory_space<vmem>>, vector<16x16xf32>,
    %c8_57 = arith.constant 8 : index
    %c126_58 = arith.constant 126 : index
    %81 = vector.load %arg8[%c8_57, %c126_58] : memref<26x146xf32, #tpu.memory_space<vmem>>, vector<16x16xf32>
    %cst_59 = arith.constant 0.135335281 : f32
    %82 = vector.broadcast %cst_59 : f32 to vector<16x16xf32>
    %83 = arith.mulf %82, %81 : vector<16x16xf32>
    %c8_60 = arith.constant 8 : index
    %c127_61 = arith.constant 127 : index
    %84 = vector.load %arg8[%c8_60, %c127_61] : memref<26x146xf32, #tpu.memory_space<vmem>>, vector<16x16xf32>
    %cst_62 = arith.constant 0.606530666 : f32
    %85 = vector.broadcast %cst_62 : f32 to vector<16x16xf32>
    %86 = arith.mulf %85, %84 : vector<16x16xf32>
    %87 = arith.addf %83, %86 : vector<16x16xf32>
    %c8_63 = arith.constant 8 : index
    %c128_64 = arith.constant 128 : index
    %88 = vector.load %arg8[%c8_63, %c128_64] : memref<26x146xf32, #tpu.memory_space<vmem>>, vector<16x16xf32>
    %cst_65 = arith.constant 1.000000e+00 : f32
    %89 = vector.broadcast %cst_65 : f32 to vector<16x16xf32>
    %90 = arith.mulf %89, %88 : vector<16x16xf32>
    %91 = arith.addf %87, %90 : vector<16x16xf32>
    %c8_66 = arith.constant 8 : index
    %c129_67 = arith.constant 129 : index
    %92 = vector.load %arg8[%c8_66, %c129_67] : memref<26x146xf32, #tpu.memory_space<vmem>>, vector<16x16xf32>
    %cst_68 = arith.constant 0.606530666 : f32
    %93 = vector.broadcast %cst_68 : f32 to vector<16x16xf32>
    %94 = arith.mulf %93, %92 : vector<16x16xf32>
    %95 = arith.addf %91, %94 : vector<16x16xf32>
    %c8_69 = arith.constant 8 : index
    %c130_70 = arith.constant 130 : index
    %96 = vector.load %arg8[%c8_69, %c130_70] : memref<26x146xf32, #tpu.memory_space<vmem>>, vector<16x16xf32>
    %cst_71 = arith.constant 0.135335281 : f32
    %97 = vector.broadcast %cst_71 : f32 to vector<16x16xf32>
    %98 = arith.mulf %97, %96 : vector<16x16xf32>
    %99 = arith.addf %95, %98 : vector<16x16xf32>
    %c8_72 = arith.constant 8 : index
    %c128_73 = arith.constant 128 : index
    %100 = vector.load %arg8[%c8_72, %c128_73] : memref<26x146xf32, #tpu.memory_space<vmem>>, vector<16x16xf32>
    tpu.vector_store %arg8[%c8_72, %c128_73], %99 {strides = array<i32>} : memref<26x146xf32, #tpu.memory_space<vmem>>, vector<16x16xf32>,
    %c6_74 = arith.constant 6 : index
    %c128_75 = arith.constant 128 : index
    %101 = vector.load %arg8[%c6_74, %c128_75] : memref<26x146xf32, #tpu.memory_space<vmem>>, vector<16x16xf32>
    %cst_76 = arith.constant 0.135335281 : f32
    %102 = vector.broadcast %cst_76 : f32 to vector<16x16xf32>
    %103 = arith.mulf %102, %101 : vector<16x16xf32>
    %c7_77 = arith.constant 7 : index
    %c128_78 = arith.constant 128 : index
    %104 = vector.load %arg8[%c7_77, %c128_78] : memref<26x146xf32, #tpu.memory_space<vmem>>, vector<16x16xf32>
    %cst_79 = arith.constant 0.606530666 : f32
    %105 = vector.broadcast %cst_79 : f32 to vector<16x16xf32>
    %106 = arith.mulf %105, %104 : vector<16x16xf32>
    %107 = arith.addf %103, %106 : vector<16x16xf32>
    %c8_80 = arith.constant 8 : index
    %c128_81 = arith.constant 128 : index
    %108 = vector.load %arg8[%c8_80, %c128_81] : memref<26x146xf32, #tpu.memory_space<vmem>>, vector<16x16xf32>
    %cst_82 = arith.constant 1.000000e+00 : f32
    %109 = vector.broadcast %cst_82 : f32 to vector<16x16xf32>
    %110 = arith.mulf %109, %108 : vector<16x16xf32>
    %111 = arith.addf %107, %110 : vector<16x16xf32>
    %c9_83 = arith.constant 9 : index
    %c128_84 = arith.constant 128 : index
    %112 = vector.load %arg8[%c9_83, %c128_84] : memref<26x146xf32, #tpu.memory_space<vmem>>, vector<16x16xf32>
    %cst_85 = arith.constant 0.606530666 : f32
    %113 = vector.broadcast %cst_85 : f32 to vector<16x16xf32>
    %114 = arith.mulf %113, %112 : vector<16x16xf32>
    %115 = arith.addf %111, %114 : vector<16x16xf32>
    %c10_86 = arith.constant 10 : index
    %c128_87 = arith.constant 128 : index
    %116 = vector.load %arg8[%c10_86, %c128_87] : memref<26x146xf32, #tpu.memory_space<vmem>>, vector<16x16xf32>
    %cst_88 = arith.constant 0.135335281 : f32
    %117 = vector.broadcast %cst_88 : f32 to vector<16x16xf32>
    %118 = arith.mulf %117, %116 : vector<16x16xf32>
    %119 = arith.addf %115, %118 : vector<16x16xf32>
    %c1_89 = arith.constant 1 : index
    %c0_90 = arith.constant 0 : index
    %c0_91 = arith.constant 0 : index
    %120 = vector.load %arg2[%c1_89, %c0_90, %c0_91] : memref<3x16x16xf32, #tpu.memory_space<vmem>>, vector<1x16x16xf32>
    %121 = vector.shape_cast %120 : vector<1x16x16xf32> to vector<16x16xf32>
    %122 = vector.shape_cast %119 : vector<16x16xf32> to vector<1x16x16xf32>
    tpu.vector_store %arg2[%c1_89, %c0_90, %c0_91], %122 {strides = array<i32>} : memref<3x16x16xf32, #tpu.memory_space<vmem>>, vector<1x16x16xf32>,
    %c8_92 = arith.constant 8 : index
    %c128_93 = arith.constant 128 : index
    %123 = vector.load %arg8[%c8_92, %c128_93] : memref<26x146xf32, #tpu.memory_space<vmem>>, vector<16x16xf32>
    tpu.vector_store %arg8[%c8_92, %c128_93], %119 {strides = array<i32>} : memref<26x146xf32, #tpu.memory_space<vmem>>, vector<16x16xf32>,
    %c7_94 = arith.constant 7 : index
    %c127_95 = arith.constant 127 : index
    %124 = vector.load %arg8[%c7_94, %c127_95] : memref<26x146xf32, #tpu.memory_space<vmem>>, vector<16x16xf32>
    %c7_96 = arith.constant 7 : index
    %c128_97 = arith.constant 128 : index
    %125 = vector.load %arg8[%c7_96, %c128_97] : memref<26x146xf32, #tpu.memory_space<vmem>>, vector<16x16xf32>
    %c7_98 = arith.constant 7 : index
    %c129_99 = arith.constant 129 : index
    %126 = vector.load %arg8[%c7_98, %c129_99] : memref<26x146xf32, #tpu.memory_space<vmem>>, vector<16x16xf32>
    %c8_100 = arith.constant 8 : index
    %c127_101 = arith.constant 127 : index
    %127 = vector.load %arg8[%c8_100, %c127_101] : memref<26x146xf32, #tpu.memory_space<vmem>>, vector<16x16xf32>
    %c8_102 = arith.constant 8 : index
    %c129_103 = arith.constant 129 : index
    %128 = vector.load %arg8[%c8_102, %c129_103] : memref<26x146xf32, #tpu.memory_space<vmem>>, vector<16x16xf32>
    %c9_104 = arith.constant 9 : index
    %c127_105 = arith.constant 127 : index
    %129 = vector.load %arg8[%c9_104, %c127_105] : memref<26x146xf32, #tpu.memory_space<vmem>>, vector<16x16xf32>
    %c9_106 = arith.constant 9 : index
    %c128_107 = arith.constant 128 : index
    %130 = vector.load %arg8[%c9_106, %c128_107] : memref<26x146xf32, #tpu.memory_space<vmem>>, vector<16x16xf32>
    %c9_108 = arith.constant 9 : index
    %c129_109 = arith.constant 129 : index
    %131 = vector.load %arg8[%c9_108, %c129_109] : memref<26x146xf32, #tpu.memory_space<vmem>>, vector<16x16xf32>
    %cst_110 = arith.constant 2.000000e+00 : f32
    %132 = vector.broadcast %cst_110 : f32 to vector<16x16xf32>
    %133 = arith.mulf %132, %127 : vector<16x16xf32>
    %134 = arith.addf %124, %133 : vector<16x16xf32>
    %135 = arith.addf %134, %129 : vector<16x16xf32>
    %cst_111 = arith.constant 2.000000e+00 : f32
    %136 = vector.broadcast %cst_111 : f32 to vector<16x16xf32>
    %137 = arith.mulf %136, %128 : vector<16x16xf32>
    %138 = arith.addf %126, %137 : vector<16x16xf32>
    %139 = arith.addf %138, %131 : vector<16x16xf32>
    %140 = arith.subf %135, %139 : vector<16x16xf32>
    %cst_112 = arith.constant 2.000000e+00 : f32
    %141 = vector.broadcast %cst_112 : f32 to vector<16x16xf32>
    %142 = arith.mulf %141, %125 : vector<16x16xf32>
    %143 = arith.addf %124, %142 : vector<16x16xf32>
    %144 = arith.addf %143, %126 : vector<16x16xf32>
    %cst_113 = arith.constant 2.000000e+00 : f32
    %145 = vector.broadcast %cst_113 : f32 to vector<16x16xf32>
    %146 = arith.mulf %145, %130 : vector<16x16xf32>
    %147 = arith.addf %129, %146 : vector<16x16xf32>
    %148 = arith.addf %147, %131 : vector<16x16xf32>
    %149 = arith.subf %144, %148 : vector<16x16xf32>
    %150 = arith.mulf %140, %140 : vector<16x16xf32>
    %151 = arith.mulf %149, %149 : vector<16x16xf32>
    %152 = arith.addf %150, %151 : vector<16x16xf32>
    %153 = math.sqrt %152 : vector<16x16xf32>
    %c2 = arith.constant 2 : index
    %c0_114 = arith.constant 0 : index
    %c0_115 = arith.constant 0 : index
    %154 = vector.load %arg1[%c2, %c0_114, %c0_115] : memref<3x16x16xf32, #tpu.memory_space<vmem>>, vector<1x16x16xf32>
    %155 = vector.shape_cast %154 : vector<1x16x16xf32> to vector<16x16xf32>
    %c8_116 = arith.constant 8 : index
    %c128_117 = arith.constant 128 : index
    %156 = vector.load %arg8[%c8_116, %c128_117] : memref<26x146xf32, #tpu.memory_space<vmem>>, vector<16x16xf32>
    tpu.vector_store %arg8[%c8_116, %c128_117], %155 {strides = array<i32>} : memref<26x146xf32, #tpu.memory_space<vmem>>, vector<16x16xf32>,
    %c8_118 = arith.constant 8 : index
    %c126_119 = arith.constant 126 : index
    %157 = vector.load %arg8[%c8_118, %c126_119] : memref<26x146xf32, #tpu.memory_space<vmem>>, vector<16x16xf32>
    %cst_120 = arith.constant 0.135335281 : f32
    %158 = vector.broadcast %cst_120 : f32 to vector<16x16xf32>
    %159 = arith.mulf %158, %157 : vector<16x16xf32>
    %c8_121 = arith.constant 8 : index
    %c127_122 = arith.constant 127 : index
    %160 = vector.load %arg8[%c8_121, %c127_122] : memref<26x146xf32, #tpu.memory_space<vmem>>, vector<16x16xf32>
    %cst_123 = arith.constant 0.606530666 : f32
    %161 = vector.broadcast %cst_123 : f32 to vector<16x16xf32>
    %162 = arith.mulf %161, %160 : vector<16x16xf32>
    %163 = arith.addf %159, %162 : vector<16x16xf32>
    %c8_124 = arith.constant 8 : index
    %c128_125 = arith.constant 128 : index
    %164 = vector.load %arg8[%c8_124, %c128_125] : memref<26x146xf32, #tpu.memory_space<vmem>>, vector<16x16xf32>
    %cst_126 = arith.constant 1.000000e+00 : f32
    %165 = vector.broadcast %cst_126 : f32 to vector<16x16xf32>
    %166 = arith.mulf %165, %164 : vector<16x16xf32>
    %167 = arith.addf %163, %166 : vector<16x16xf32>
    %c8_127 = arith.constant 8 : index
    %c129_128 = arith.constant 129 : index
    %168 = vector.load %arg8[%c8_127, %c129_128] : memref<26x146xf32, #tpu.memory_space<vmem>>, vector<16x16xf32>
    %cst_129 = arith.constant 0.606530666 : f32
    %169 = vector.broadcast %cst_129 : f32 to vector<16x16xf32>
    %170 = arith.mulf %169, %168 : vector<16x16xf32>
    %171 = arith.addf %167, %170 : vector<16x16xf32>
    %c8_130 = arith.constant 8 : index
    %c130_131 = arith.constant 130 : index
    %172 = vector.load %arg8[%c8_130, %c130_131] : memref<26x146xf32, #tpu.memory_space<vmem>>, vector<16x16xf32>
    %cst_132 = arith.constant 0.135335281 : f32
    %173 = vector.broadcast %cst_132 : f32 to vector<16x16xf32>
    %174 = arith.mulf %173, %172 : vector<16x16xf32>
    %175 = arith.addf %171, %174 : vector<16x16xf32>
    %c8_133 = arith.constant 8 : index
    %c128_134 = arith.constant 128 : index
    %176 = vector.load %arg8[%c8_133, %c128_134] : memref<26x146xf32, #tpu.memory_space<vmem>>, vector<16x16xf32>
    tpu.vector_store %arg8[%c8_133, %c128_134], %175 {strides = array<i32>} : memref<26x146xf32, #tpu.memory_space<vmem>>, vector<16x16xf32>,
    %c6_135 = arith.constant 6 : index
    %c128_136 = arith.constant 128 : index
    %177 = vector.load %arg8[%c6_135, %c128_136] : memref<26x146xf32, #tpu.memory_space<vmem>>, vector<16x16xf32>
    %cst_137 = arith.constant 0.135335281 : f32
    %178 = vector.broadcast %cst_137 : f32 to vector<16x16xf32>
    %179 = arith.mulf %178, %177 : vector<16x16xf32>
    %c7_138 = arith.constant 7 : index
    %c128_139 = arith.constant 128 : index
    %180 = vector.load %arg8[%c7_138, %c128_139] : memref<26x146xf32, #tpu.memory_space<vmem>>, vector<16x16xf32>
    %cst_140 = arith.constant 0.606530666 : f32
    %181 = vector.broadcast %cst_140 : f32 to vector<16x16xf32>
    %182 = arith.mulf %181, %180 : vector<16x16xf32>
    %183 = arith.addf %179, %182 : vector<16x16xf32>
    %c8_141 = arith.constant 8 : index
    %c128_142 = arith.constant 128 : index
    %184 = vector.load %arg8[%c8_141, %c128_142] : memref<26x146xf32, #tpu.memory_space<vmem>>, vector<16x16xf32>
    %cst_143 = arith.constant 1.000000e+00 : f32
    %185 = vector.broadcast %cst_143 : f32 to vector<16x16xf32>
    %186 = arith.mulf %185, %184 : vector<16x16xf32>
    %187 = arith.addf %183, %186 : vector<16x16xf32>
    %c9_144 = arith.constant 9 : index
    %c128_145 = arith.constant 128 : index
    %188 = vector.load %arg8[%c9_144, %c128_145] : memref<26x146xf32, #tpu.memory_space<vmem>>, vector<16x16xf32>
    %cst_146 = arith.constant 0.606530666 : f32
    %189 = vector.broadcast %cst_146 : f32 to vector<16x16xf32>
    %190 = arith.mulf %189, %188 : vector<16x16xf32>
    %191 = arith.addf %187, %190 : vector<16x16xf32>
    %c10_147 = arith.constant 10 : index
    %c128_148 = arith.constant 128 : index
    %192 = vector.load %arg8[%c10_147, %c128_148] : memref<26x146xf32, #tpu.memory_space<vmem>>, vector<16x16xf32>
    %cst_149 = arith.constant 0.135335281 : f32
    %193 = vector.broadcast %cst_149 : f32 to vector<16x16xf32>
    %194 = arith.mulf %193, %192 : vector<16x16xf32>
    %195 = arith.addf %191, %194 : vector<16x16xf32>
    %c2_150 = arith.constant 2 : index
    %c0_151 = arith.constant 0 : index
    %c0_152 = arith.constant 0 : index
    %196 = vector.load %arg2[%c2_150, %c0_151, %c0_152] : memref<3x16x16xf32, #tpu.memory_space<vmem>>, vector<1x16x16xf32>
    %197 = vector.shape_cast %196 : vector<1x16x16xf32> to vector<16x16xf32>
    %198 = vector.shape_cast %195 : vector<16x16xf32> to vector<1x16x16xf32>
    tpu.vector_store %arg2[%c2_150, %c0_151, %c0_152], %198 {strides = array<i32>} : memref<3x16x16xf32, #tpu.memory_space<vmem>>, vector<1x16x16xf32>,
    %c8_153 = arith.constant 8 : index
    %c128_154 = arith.constant 128 : index
    %199 = vector.load %arg8[%c8_153, %c128_154] : memref<26x146xf32, #tpu.memory_space<vmem>>, vector<16x16xf32>
    tpu.vector_store %arg8[%c8_153, %c128_154], %195 {strides = array<i32>} : memref<26x146xf32, #tpu.memory_space<vmem>>, vector<16x16xf32>,
    %c7_155 = arith.constant 7 : index
    %c127_156 = arith.constant 127 : index
    %200 = vector.load %arg8[%c7_155, %c127_156] : memref<26x146xf32, #tpu.memory_space<vmem>>, vector<16x16xf32>
    %c7_157 = arith.constant 7 : index
    %c128_158 = arith.constant 128 : index
    %201 = vector.load %arg8[%c7_157, %c128_158] : memref<26x146xf32, #tpu.memory_space<vmem>>, vector<16x16xf32>
    %c7_159 = arith.constant 7 : index
    %c129_160 = arith.constant 129 : index
    %202 = vector.load %arg8[%c7_159, %c129_160] : memref<26x146xf32, #tpu.memory_space<vmem>>, vector<16x16xf32>
    %c8_161 = arith.constant 8 : index
    %c127_162 = arith.constant 127 : index
    %203 = vector.load %arg8[%c8_161, %c127_162] : memref<26x146xf32, #tpu.memory_space<vmem>>, vector<16x16xf32>
    %c8_163 = arith.constant 8 : index
    %c129_164 = arith.constant 129 : index
    %204 = vector.load %arg8[%c8_163, %c129_164] : memref<26x146xf32, #tpu.memory_space<vmem>>, vector<16x16xf32>
    %c9_165 = arith.constant 9 : index
    %c127_166 = arith.constant 127 : index
    %205 = vector.load %arg8[%c9_165, %c127_166] : memref<26x146xf32, #tpu.memory_space<vmem>>, vector<16x16xf32>
    %c9_167 = arith.constant 9 : index
    %c128_168 = arith.constant 128 : index
    %206 = vector.load %arg8[%c9_167, %c128_168] : memref<26x146xf32, #tpu.memory_space<vmem>>, vector<16x16xf32>
    %c9_169 = arith.constant 9 : index
    %c129_170 = arith.constant 129 : index
    %207 = vector.load %arg8[%c9_169, %c129_170] : memref<26x146xf32, #tpu.memory_space<vmem>>, vector<16x16xf32>
    %cst_171 = arith.constant 2.000000e+00 : f32
    %208 = vector.broadcast %cst_171 : f32 to vector<16x16xf32>
    %209 = arith.mulf %208, %203 : vector<16x16xf32>
    %210 = arith.addf %200, %209 : vector<16x16xf32>
    %211 = arith.addf %210, %205 : vector<16x16xf32>
    %cst_172 = arith.constant 2.000000e+00 : f32
    %212 = vector.broadcast %cst_172 : f32 to vector<16x16xf32>
    %213 = arith.mulf %212, %204 : vector<16x16xf32>
    %214 = arith.addf %202, %213 : vector<16x16xf32>
    %215 = arith.addf %214, %207 : vector<16x16xf32>
    %216 = arith.subf %211, %215 : vector<16x16xf32>
    %cst_173 = arith.constant 2.000000e+00 : f32
    %217 = vector.broadcast %cst_173 : f32 to vector<16x16xf32>
    %218 = arith.mulf %217, %201 : vector<16x16xf32>
    %219 = arith.addf %200, %218 : vector<16x16xf32>
    %220 = arith.addf %219, %202 : vector<16x16xf32>
    %cst_174 = arith.constant 2.000000e+00 : f32
    %221 = vector.broadcast %cst_174 : f32 to vector<16x16xf32>
    %222 = arith.mulf %221, %206 : vector<16x16xf32>
    %223 = arith.addf %205, %222 : vector<16x16xf32>
    %224 = arith.addf %223, %207 : vector<16x16xf32>
    %225 = arith.subf %220, %224 : vector<16x16xf32>
    %226 = arith.mulf %216, %216 : vector<16x16xf32>
    %227 = arith.mulf %225, %225 : vector<16x16xf32>
    %228 = arith.addf %226, %227 : vector<16x16xf32>
    %229 = math.sqrt %228 : vector<16x16xf32>
    %230 = arith.addf %77, %153 : vector<16x16xf32>
    %231 = arith.addf %230, %229 : vector<16x16xf32>
    %232 = arith.addf %64, %140 : vector<16x16xf32>
    %233 = arith.addf %232, %216 : vector<16x16xf32>
    %234 = arith.addf %73, %149 : vector<16x16xf32>
    %235 = arith.addf %234, %225 : vector<16x16xf32>
    %c0_175 = arith.constant 0 : index
    %c0_176 = arith.constant 0 : index
    %236 = vector.load %arg3[%c0_175, %c0_176] : memref<16x16xf32, #tpu.memory_space<vmem>>, vector<16x16xf32>
    tpu.vector_store %arg3[%c0_175, %c0_176], %231 {strides = array<i32>} : memref<16x16xf32, #tpu.memory_space<vmem>>, vector<16x16xf32>,
    %cst_177 = arith.constant 1.000000e+01 : f32
    %237 = vector.broadcast %cst_177 : f32 to vector<16x16xf32>
    %238 = arith.cmpf olt, %231, %237 : vector<16x16xf32>
    %cst_178 = arith.constant 0.000000e+00 : f32
    %239 = vector.broadcast %cst_178 : f32 to vector<16x16xf32>
    %240 = arith.select %238, %239, %231 : vector<16x16xi1>, vector<16x16xf32>
    %c0_179 = arith.constant 0 : index
    %c0_180 = arith.constant 0 : index
    %241 = vector.load %arg7[%c0_179, %c0_180] : memref<16x16xf32, #tpu.memory_space<vmem>>, vector<16x16xf32>
    tpu.vector_store %arg7[%c0_179, %c0_180], %240 {strides = array<i32>} : memref<16x16xf32, #tpu.memory_space<vmem>>, vector<16x16xf32>,
    %242 = arith.mulf %233, %233 : vector<16x16xf32>
    %243 = arith.mulf %235, %235 : vector<16x16xf32>
    %244 = arith.addf %242, %243 : vector<16x16xf32>
    %cst_181 = arith.constant 0.000000e+00 : f32
    %245 = vector.broadcast %cst_181 : f32 to vector<16x16xf32>
    %246 = arith.cmpf olt, %233, %245 : vector<16x16xf32>
    %cst_182 = arith.constant 0.853553652 : f32
    %247 = vector.broadcast %cst_182 : f32 to vector<16x16xf32>
    %248 = arith.mulf %244, %247 : vector<16x16xf32>
    %249 = arith.cmpf olt, %242, %248 : vector<16x16xf32>
    %250 = arith.ori %246, %249 : vector<16x16xi1>
    %cst_183 = arith.constant 0.146447316 : f32
    %251 = vector.broadcast %cst_183 : f32 to vector<16x16xf32>
    %252 = arith.mulf %244, %251 : vector<16x16xf32>
    %253 = arith.cmpf olt, %242, %252 : vector<16x16xf32>
    %254 = arith.ori %246, %253 : vector<16x16xi1>
    %cst_184 = arith.constant 0.146445438 : f32
    %255 = vector.broadcast %cst_184 : f32 to vector<16x16xf32>
    %256 = arith.mulf %244, %255 : vector<16x16xf32>
    %257 = arith.cmpf ogt, %242, %256 : vector<16x16xf32>
    %258 = arith.andi %246, %257 : vector<16x16xi1>
    %cst_185 = arith.constant 0.853551745 : f32
    %259 = vector.broadcast %cst_185 : f32 to vector<16x16xf32>
    %260 = arith.mulf %244, %259 : vector<16x16xf32>
    %261 = arith.cmpf ogt, %242, %260 : vector<16x16xf32>
    %262 = arith.andi %246, %261 : vector<16x16xi1>
    %263 = arith.extui %250 : vector<16x16xi1> to vector<16x16xi32>
    %264 = arith.extui %254 : vector<16x16xi1> to vector<16x16xi32>
    %265 = arith.addi %263, %264 : vector<16x16xi32>
    %266 = arith.extui %258 : vector<16x16xi1> to vector<16x16xi32>
    %267 = arith.addi %265, %266 : vector<16x16xi32>
    %268 = arith.extui %262 : vector<16x16xi1> to vector<16x16xi32>
    %269 = arith.addi %267, %268 : vector<16x16xi32>
    %cst_186 = arith.constant 0.000000e+00 : f32
    %270 = vector.broadcast %cst_186 : f32 to vector<16x16xf32>
    %271 = arith.cmpf oge, %235, %270 : vector<16x16xf32>
    %c0_i32 = arith.constant 0 : i32
    %272 = vector.broadcast %c0_i32 : i32 to vector<16x16xi32>
    %273 = arith.subi %272, %269 : vector<16x16xi32>
    %274 = arith.select %271, %269, %273 : vector<16x16xi1>, vector<16x16xi32>
    %c4_i32 = arith.constant 4 : i32
    %275 = vector.broadcast %c4_i32 : i32 to vector<16x16xi32>
    %276 = arith.addi %274, %275 : vector<16x16xi32>
    %277 = arith.sitofp %276 : vector<16x16xi32> to vector<16x16xf32>
    %cst_187 = arith.constant 4.500000e+01 : f32
    %278 = vector.broadcast %cst_187 : f32 to vector<16x16xf32>
    %279 = arith.mulf %277, %278 : vector<16x16xf32>
    %c0_188 = arith.constant 0 : index
    %c0_189 = arith.constant 0 : index
    %280 = vector.load %arg4[%c0_188, %c0_189] : memref<16x16xf32, #tpu.memory_space<vmem>>, vector<16x16xf32>
    tpu.vector_store %arg4[%c0_188, %c0_189], %279 {strides = array<i32>} : memref<16x16xf32, #tpu.memory_space<vmem>>, vector<16x16xf32>,
    %c4_i32_190 = arith.constant 4 : i32
    %281 = vector.broadcast %c4_i32_190 : i32 to vector<16x16xi32>
    %282 = arith.cmpi eq, %274, %281 : vector<16x16xi32>
    %c4_i32_191 = arith.constant 4 : i32
    %283 = vector.broadcast %c4_i32_191 : i32 to vector<16x16xi32>
    %284 = arith.addi %274, %283 : vector<16x16xi32>
    %c0_i32_192 = arith.constant 0 : i32
    %285 = vector.broadcast %c0_i32_192 : i32 to vector<16x16xi32>
    %286 = arith.select %282, %285, %284 : vector<16x16xi1>, vector<16x16xi32>
    %c0_i32_193 = arith.constant 0 : i32
    %287 = vector.broadcast %c0_i32_193 : i32 to vector<16x16xi32>
    %288 = arith.cmpi slt, %274, %287 : vector<16x16xi32>
    %c8_i32 = arith.constant 8 : i32
    %289 = vector.broadcast %c8_i32 : i32 to vector<16x16xi32>
    %290 = arith.addi %274, %289 : vector<16x16xi32>
    %291 = arith.select %288, %290, %274 : vector<16x16xi1>, vector<16x16xi32>
    %c8_194 = arith.constant 8 : index
    %c128_195 = arith.constant 128 : index
    %292 = vector.load %arg8[%c8_194, %c128_195] : memref<26x146xf32, #tpu.memory_space<vmem>>, vector<16x16xf32>
    tpu.vector_store %arg8[%c8_194, %c128_195], %231 {strides = array<i32>} : memref<26x146xf32, #tpu.memory_space<vmem>>, vector<16x16xf32>,
    %cst_196 = arith.constant 0.000000e+00 : f32
    %293 = vector.broadcast %cst_196 : f32 to vector<16x16xf32>
    %cst_197 = arith.constant 0.000000e+00 : f32
    %294 = vector.broadcast %cst_197 : f32 to vector<16x16xf32>
    %c8_198 = arith.constant 8 : index
    %c129_199 = arith.constant 129 : index
    %295 = vector.load %arg8[%c8_198, %c129_199] : memref<26x146xf32, #tpu.memory_space<vmem>>, vector<16x16xf32>
    %c0_i32_200 = arith.constant 0 : i32
    %296 = vector.broadcast %c0_i32_200 : i32 to vector<16x16xi32>
    %297 = arith.cmpi eq, %286, %296 : vector<16x16xi32>
    %298 = arith.select %297, %295, %293 : vector<16x16xi1>, vector<16x16xf32>
    %c0_i32_201 = arith.constant 0 : i32
    %299 = vector.broadcast %c0_i32_201 : i32 to vector<16x16xi32>
    %300 = arith.cmpi eq, %291, %299 : vector<16x16xi32>
    %301 = arith.select %300, %295, %294 : vector<16x16xi1>, vector<16x16xf32>
    %c9_202 = arith.constant 9 : index
    %c129_203 = arith.constant 129 : index
    %302 = vector.load %arg8[%c9_202, %c129_203] : memref<26x146xf32, #tpu.memory_space<vmem>>, vector<16x16xf32>
    %c1_i32 = arith.constant 1 : i32
    %303 = vector.broadcast %c1_i32 : i32 to vector<16x16xi32>
    %304 = arith.cmpi eq, %286, %303 : vector<16x16xi32>
    %305 = arith.select %304, %302, %298 : vector<16x16xi1>, vector<16x16xf32>
    %c1_i32_204 = arith.constant 1 : i32
    %306 = vector.broadcast %c1_i32_204 : i32 to vector<16x16xi32>
    %307 = arith.cmpi eq, %291, %306 : vector<16x16xi32>
    %308 = arith.select %307, %302, %301 : vector<16x16xi1>, vector<16x16xf32>
    %c9_205 = arith.constant 9 : index
    %c128_206 = arith.constant 128 : index
    %309 = vector.load %arg8[%c9_205, %c128_206] : memref<26x146xf32, #tpu.memory_space<vmem>>, vector<16x16xf32>
    %c2_i32 = arith.constant 2 : i32
    %310 = vector.broadcast %c2_i32 : i32 to vector<16x16xi32>
    %311 = arith.cmpi eq, %286, %310 : vector<16x16xi32>
    %312 = arith.select %311, %309, %305 : vector<16x16xi1>, vector<16x16xf32>
    %c2_i32_207 = arith.constant 2 : i32
    %313 = vector.broadcast %c2_i32_207 : i32 to vector<16x16xi32>
    %314 = arith.cmpi eq, %291, %313 : vector<16x16xi32>
    %315 = arith.select %314, %309, %308 : vector<16x16xi1>, vector<16x16xf32>
    %c9_208 = arith.constant 9 : index
    %c127_209 = arith.constant 127 : index
    %316 = vector.load %arg8[%c9_208, %c127_209] : memref<26x146xf32, #tpu.memory_space<vmem>>, vector<16x16xf32>
    %c3_i32 = arith.constant 3 : i32
    %317 = vector.broadcast %c3_i32 : i32 to vector<16x16xi32>
    %318 = arith.cmpi eq, %286, %317 : vector<16x16xi32>
    %319 = arith.select %318, %316, %312 : vector<16x16xi1>, vector<16x16xf32>
    %c3_i32_210 = arith.constant 3 : i32
    %320 = vector.broadcast %c3_i32_210 : i32 to vector<16x16xi32>
    %321 = arith.cmpi eq, %291, %320 : vector<16x16xi32>
    %322 = arith.select %321, %316, %315 : vector<16x16xi1>, vector<16x16xf32>
    %c8_211 = arith.constant 8 : index
    %c127_212 = arith.constant 127 : index
    %323 = vector.load %arg8[%c8_211, %c127_212] : memref<26x146xf32, #tpu.memory_space<vmem>>, vector<16x16xf32>
    %c4_i32_213 = arith.constant 4 : i32
    %324 = vector.broadcast %c4_i32_213 : i32 to vector<16x16xi32>
    %325 = arith.cmpi eq, %286, %324 : vector<16x16xi32>
    %326 = arith.select %325, %323, %319 : vector<16x16xi1>, vector<16x16xf32>
    %c4_i32_214 = arith.constant 4 : i32
    %327 = vector.broadcast %c4_i32_214 : i32 to vector<16x16xi32>
    %328 = arith.cmpi eq, %291, %327 : vector<16x16xi32>
    %329 = arith.select %328, %323, %322 : vector<16x16xi1>, vector<16x16xf32>
    %c7_215 = arith.constant 7 : index
    %c127_216 = arith.constant 127 : index
    %330 = vector.load %arg8[%c7_215, %c127_216] : memref<26x146xf32, #tpu.memory_space<vmem>>, vector<16x16xf32>
    %c5_i32 = arith.constant 5 : i32
    %331 = vector.broadcast %c5_i32 : i32 to vector<16x16xi32>
    %332 = arith.cmpi eq, %286, %331 : vector<16x16xi32>
    %333 = arith.select %332, %330, %326 : vector<16x16xi1>, vector<16x16xf32>
    %c5_i32_217 = arith.constant 5 : i32
    %334 = vector.broadcast %c5_i32_217 : i32 to vector<16x16xi32>
    %335 = arith.cmpi eq, %291, %334 : vector<16x16xi32>
    %336 = arith.select %335, %330, %329 : vector<16x16xi1>, vector<16x16xf32>
    %c7_218 = arith.constant 7 : index
    %c128_219 = arith.constant 128 : index
    %337 = vector.load %arg8[%c7_218, %c128_219] : memref<26x146xf32, #tpu.memory_space<vmem>>, vector<16x16xf32>
    %c6_i32 = arith.constant 6 : i32
    %338 = vector.broadcast %c6_i32 : i32 to vector<16x16xi32>
    %339 = arith.cmpi eq, %286, %338 : vector<16x16xi32>
    %340 = arith.select %339, %337, %333 : vector<16x16xi1>, vector<16x16xf32>
    %c6_i32_220 = arith.constant 6 : i32
    %341 = vector.broadcast %c6_i32_220 : i32 to vector<16x16xi32>
    %342 = arith.cmpi eq, %291, %341 : vector<16x16xi32>
    %343 = arith.select %342, %337, %336 : vector<16x16xi1>, vector<16x16xf32>
    %c7_221 = arith.constant 7 : index
    %c129_222 = arith.constant 129 : index
    %344 = vector.load %arg8[%c7_221, %c129_222] : memref<26x146xf32, #tpu.memory_space<vmem>>, vector<16x16xf32>
    %c7_i32 = arith.constant 7 : i32
    %345 = vector.broadcast %c7_i32 : i32 to vector<16x16xi32>
    %346 = arith.cmpi eq, %286, %345 : vector<16x16xi32>
    %347 = arith.select %346, %344, %340 : vector<16x16xi1>, vector<16x16xf32>
    %c7_i32_223 = arith.constant 7 : i32
    %348 = vector.broadcast %c7_i32_223 : i32 to vector<16x16xi32>
    %349 = arith.cmpi eq, %291, %348 : vector<16x16xi32>
    %350 = arith.select %349, %344, %343 : vector<16x16xi1>, vector<16x16xf32>
    %351 = arith.subf %231, %347 : vector<16x16xf32>
    %352 = arith.subf %231, %350 : vector<16x16xf32>
    %353 = arith.minimumf %351, %352 : vector<16x16xf32>
    %cst_224 = arith.constant 0.000000e+00 : f32
    %354 = vector.broadcast %cst_224 : f32 to vector<16x16xf32>
    %355 = arith.cmpf ogt, %353, %354 : vector<16x16xf32>
    %cst_225 = arith.constant 0.000000e+00 : f32
    %356 = vector.broadcast %cst_225 : f32 to vector<16x16xf32>
    %357 = arith.select %355, %231, %356 : vector<16x16xi1>, vector<16x16xf32>
    %c0_226 = arith.constant 0 : index
    %c0_227 = arith.constant 0 : index
    %358 = vector.load %arg5[%c0_226, %c0_227] : memref<16x16xf32, #tpu.memory_space<vmem>>, vector<16x16xf32>
    tpu.vector_store %arg5[%c0_226, %c0_227], %357 {strides = array<i32>} : memref<16x16xf32, #tpu.memory_space<vmem>>, vector<16x16xf32>,
    %cst_228 = arith.constant 1.000000e+01 : f32
    %359 = vector.broadcast %cst_228 : f32 to vector<16x16xf32>
    %360 = arith.cmpf olt, %357, %359 : vector<16x16xf32>
    %cst_229 = arith.constant 0.000000e+00 : f32
    %361 = vector.broadcast %cst_229 : f32 to vector<16x16xf32>
    %362 = arith.select %360, %361, %357 : vector<16x16xi1>, vector<16x16xf32>
    %c0_230 = arith.constant 0 : index
    %c0_231 = arith.constant 0 : index
    %363 = vector.load %arg6[%c0_230, %c0_231] : memref<16x16xf32, #tpu.memory_space<vmem>>, vector<16x16xf32>
    tpu.vector_store %arg6[%c0_230, %c0_231], %362 {strides = array<i32>} : memref<16x16xf32, #tpu.memory_space<vmem>>, vector<16x16xf32>,
    return
  }
  func.func @transform_0(%arg0: i32) -> (i32, i32, i32) {
    %c0_i32 = arith.constant 0 : i32
    %c0_i32_0 = arith.constant 0 : i32
    %c0_i32_1 = arith.constant 0 : i32
    %c0_i32_2 = arith.constant 0 : i32
    return %c0_i32, %c0_i32_0, %c0_i32_1 : i32, i32, i32
  }
  func.func @transform_1(%arg0: i32) -> (i32, i32, i32) {
    %c0_i32 = arith.constant 0 : i32
    %c0_i32_0 = arith.constant 0 : i32
    %c0_i32_1 = arith.constant 0 : i32
    %c0_i32_2 = arith.constant 0 : i32
    return %c0_i32, %c0_i32_0, %c0_i32_1 : i32, i32, i32
  }
  func.func @transform_2(%arg0: i32) -> (i32, i32) {
    %c0_i32 = arith.constant 0 : i32
    %c0_i32_0 = arith.constant 0 : i32
    %c0_i32_1 = arith.constant 0 : i32
    return %c0_i32, %c0_i32_0 : i32, i32
  }
  func.func @transform_3(%arg0: i32) -> (i32, i32) {
    %c0_i32 = arith.constant 0 : i32
    %c0_i32_0 = arith.constant 0 : i32
    %c0_i32_1 = arith.constant 0 : i32
    return %c0_i32, %c0_i32_0 : i32, i32
  }
  func.func @transform_4(%arg0: i32) -> (i32, i32) {
    %c0_i32 = arith.constant 0 : i32
    %c0_i32_0 = arith.constant 0 : i32
    %c0_i32_1 = arith.constant 0 : i32
    return %c0_i32, %c0_i32_0 : i32, i32
  }
  func.func @transform_5(%arg0: i32) -> (i32, i32) {
    %c0_i32 = arith.constant 0 : i32
    %c0_i32_0 = arith.constant 0 : i32
    %c0_i32_1 = arith.constant 0 : i32
    return %c0_i32, %c0_i32_0 : i32, i32
  }
  func.func @transform_6(%arg0: i32) -> (i32, i32) {
    %c0_i32 = arith.constant 0 : i32
    %c0_i32_0 = arith.constant 0 : i32
    %c0_i32_1 = arith.constant 0 : i32
    return %c0_i32, %c0_i32_0 : i32, i32
  }
}

</mosaic_0001>

<llo_original>
// kernel: canny_net_forward.1
$region0: #{canny_net_forward.1}
  #allocation0 [shape = 'u32[]', space=smem, size = 0x4, offset = 0x4, fixed_abs, tag = 'smem constant byte address 0x4 - core index']
  #allocation1 [shape = 'u32[144,128]{1,0:T(1,128)}', space=vmem, size = 0x12000, scoped, tag = 'internal scratch']
  #allocation2 [shape = 'f32[26,146]{1,0:T(8,128)}', space=vmem, size = 0x8000, scoped, tag = 'scratch operand']
  %s0 = inlined_call_operand.hbm [shape: f32[3,16,16], index: 0, kind: input, shape index: {}]
  %s1 = inlined_call_operand.hbm [shape: f32[3,16,16], index: 1, kind: output, shape index: {0}]
  %s2 = inlined_call_operand.hbm [shape: f32[16,16], index: 2, kind: output, shape index: {1}]
  %s3 = inlined_call_operand.hbm [shape: f32[16,16], index: 3, kind: output, shape index: {2}]
  %s4 = inlined_call_operand.hbm [shape: f32[16,16], index: 4, kind: output, shape index: {3}]
  %s5 = inlined_call_operand.hbm [shape: f32[16,16], index: 5, kind: output, shape index: {4}]
  %s6 = inlined_call_operand.hbm [shape: f32[16,16], index: 6, kind: output, shape index: {5}]
  %7 = xla_tuple %s1, %s2, %s3, %s4, %s5, %s6
  %s8 = sld [smem:[#allocation0]]
  $region58: #{canny_net_forward.1} parent=0
    _
  %s10 = ssub.s32 1, %s8
  %s11 = scalar_select 0, %s10, %s8
  $region1: #{canny_net_forward.1} parent=0
    #allocation3 [shape = 'u8[24576]{0}', space=vmem, size = 0x6000, scoped, tag = 'input window, operand 0, single buffered']
    #allocation4 [shape = 's32[1]{0}', space=sflag, size = 0x4, scoped, tag = 'scoped memory for canny_net_forward.1']
    #allocation5 [shape = 's32[1]{0}', space=sflag, size = 0x4, scoped, tag = 'scoped memory for canny_net_forward.1']
    #allocation6 [shape = 'u8[24576]{0}', space=vmem, size = 0x6000, scoped, tag = 'output window, operand 0, single buffered']
    #allocation7 [shape = 'u8[8192]{0}', space=vmem, size = 0x2000, scoped, tag = 'output window, operand 1, single buffered']
    #allocation8 [shape = 's32[1]{0}', space=sflag, size = 0x4, scoped, tag = 'scoped memory for canny_net_forward.1']
    #allocation9 [shape = 'u8[8192]{0}', space=vmem, size = 0x2000, scoped, tag = 'output window, operand 2, single buffered']
    #allocation10 [shape = 'u8[8192]{0}', space=vmem, size = 0x2000, scoped, tag = 'output window, operand 3, single buffered']
    #allocation11 [shape = 's32[1]{0}', space=sflag, size = 0x4, scoped, tag = 'scoped memory for canny_net_forward.1']
    #allocation12 [shape = 'u8[8192]{0}', space=vmem, size = 0x2000, scoped, tag = 'output window, operand 4, single buffered']
    #allocation13 [shape = 'u8[8192]{0}', space=vmem, size = 0x2000, scoped, tag = 'output window, operand 5, single buffered']
    #allocation14 [shape = 's32[1]{0}', space=sflag, size = 0x4, scoped, tag = 'scoped memory for canny_net_forward.1']
    %12 = vsyncpa [#allocation4], 0
    %13 = vsyncpa [#allocation5], 0
    %14 = vsyncpa [#allocation8], 0
    %15 = vsyncpa [#allocation11], 0
    %16 = vsyncpa [#allocation14], 0
    // Predicated region
    $region2: #{canny_net_forward.1} parent=1 // pred_check
      _
    $region3: #{canny_net_forward.1} parent=1 // pred_check_branch
      %18 = sbr.rel (0) target = $region5
    $region4: #{canny_net_forward.1} parent=1 // pred_region
      %s20 = ssub.s32 768, 768
      %21 = vsyncadd [#allocation4], %s20
      %s22 = sshll.u32 [#allocation3], 4
      %s23 = int_to_ptr.vmem [resolvable:$true] %s22
      %28 = dma.hbm_to_vmem [thread:$0]  %s0, 768, %s23, [#allocation4], 128, 128, 8
    $region5: #{canny_net_forward.1} parent=1 // pred_fallthru
      _
    // Predicated region
    $region6: #{canny_net_forward.1} parent=1 // pred_check
      _
    $region7: #{canny_net_forward.1} parent=1 // pred_check_branch
      %30 = sbr.rel (0) target = $region9
    $region8: #{canny_net_forward.1} parent=1 // pred_region
      %31 = dma.done [#allocation4], 768
    $region9: #{canny_net_forward.1} parent=1 // pred_fallthru
      _
    %32 = vst [vmem:[#allocation2] sm:$0xff] 0.0
    %vm33 = vcmask 146432
    %34 = vst.msk [vmem:[#allocation2 + $0x8] sm:$0xff] %vm33, 0.0
    %35 = vst [vmem:[#allocation2 + $0x10] sm:$0xff] 0.0
    %36 = vst.msk [vmem:[#allocation2 + $0x18] sm:$0xff] %vm33, 0.0
    %37 = vst [vmem:[#allocation2 + $0x20] sm:$0xff] 0.0
    %38 = vst.msk [vmem:[#allocation2 + $0x28] sm:$0xff] %vm33, 0.0
    %39 = vst [vmem:[#allocation2 + $0x30] sm:$0x3] 0.0
    %vm40 = vcmask 140288
    %41 = vst.msk [vmem:[#allocation2 + $0x38] sm:$0x3] %vm40, 0.0
    %v42 = vld [vmem:[#allocation3] sm:$0xff]
    %v43 = vld [vmem:[#allocation3 + $0x8] sm:$0xff]
    %vm44 = vcmask 130048
    %45 = vst.msk [vmem:[#allocation2 + $0x18] sm:$0xff] %vm44, %v42
    %46 = vst.msk [vmem:[#allocation2 + $0x28] sm:$0xff] %vm44, %v43
    %v47 = vld [vmem:[#allocation2 + $0x10] sm:$0xff]
    %v48 = vld [vmem:[#allocation2 + $0x18] sm:$0xff]
    %v49 = vld [vmem:[#allocation2 + $0x20] sm:$0xff]
    %v50 = vld [vmem:[#allocation2 + $0x28] sm:$0xff]
    %v51 = vmul.f32 %v47, 0.13533528
    %v52 = vmul.f32 %v48, 0.13533528
    %v53 = vmul.f32 %v49, 0.13533528
    %v54 = vmul.f32 %v50, 0.13533528
    %v55 = vmul.f32 %v47, 0.60653067
    %v56 = vmul.f32 %v48, 0.60653067
    %v57 = vmul.f32 %v49, 0.60653067
    %v58 = vmul.f32 %v50, 0.60653067
    %63 = vrot.lane.b32.xlu0 %v55, 127
    %v64 = vpop.permute.xlu0 %63
    %65 = vrot.lane.b32.xlu0 %v56, 127
    %v66 = vpop.permute.xlu0 %65
    %67 = vrot.lane.b32.xlu0 %v57, 127
    %v68 = vpop.permute.xlu0 %67
    %69 = vrot.lane.b32.xlu0 %v58, 127
    %v70 = vpop.permute.xlu0 %69
    %vm71 = vcmask 1039360
    %v72 = vsel %vm71, %v64, %v66
    %v73 = vsel %vm71, %v68, %v70
    %v78 = vadd.f32 %v51, %v72
    %v79 = vadd.f32 %v52, %v66
    %v80 = vadd.f32 %v53, %v73
    %v81 = vadd.f32 %v54, %v70
    %84 = vrot.lane.b32.xlu0 %v48, 126
    %v85 = vpop.permute.xlu0 %84
    %86 = vrot.lane.b32.xlu0 %v50, 126
    %v87 = vpop.permute.xlu0 %86
    %v90 = vadd.f32 %v78, %v85
    %v91 = vadd.f32 %v79, %v85
    %v92 = vadd.f32 %v80, %v87
    %v93 = vadd.f32 %v81, %v87
    %94 = vrot.lane.b32.xlu0 %v56, 125
    %v95 = vpop.permute.xlu0 %94
    %96 = vrot.lane.b32.xlu0 %v58, 125
    %v97 = vpop.permute.xlu0 %96
    %v100 = vadd.f32 %v90, %v95
    %v101 = vadd.f32 %v91, %v95
    %v102 = vadd.f32 %v92, %v97
    %v103 = vadd.f32 %v93, %v97
    %106 = vrot.lane.b32.xlu0 %v52, 124
    %v107 = vpop.permute.xlu0 %106
    %108 = vrot.lane.b32.xlu0 %v54, 124
    %v109 = vpop.permute.xlu0 %108
    %v112 = vadd.f32 %v100, %v107
    %v113 = vadd.f32 %v101, %v107
    %v114 = vadd.f32 %v102, %v109
    %v115 = vadd.f32 %v103, %v109
    %120 = vrot.lane.b32.xlu0 %v112, 2
    %v121 = vpop.permute.xlu0 %120
    %122 = vrot.lane.b32.xlu0 %v113, 2
    %v123 = vpop.permute.xlu0 %122
    %124 = vrot.lane.b32.xlu0 %v114, 2
    %v125 = vpop.permute.xlu0 %124
    %126 = vrot.lane.b32.xlu0 %v115, 2
    %v127 = vpop.permute.xlu0 %126
    %vm128 = vcmask 15360
    %v129 = vsel %vm128, %v121, %v123
    %v130 = vsel %vm128, %v125, %v127
    %133 = vst.msk [vmem:[#allocation2 + $0x18] sm:$0xff] %vm44, %v129
    %134 = vst.msk [vmem:[#allocation2 + $0x28] sm:$0xff] %vm44, %v130
    %v135 = vld [vmem:[#allocation2 + $0x8] sm:$0xc0]
    %v136 = vld [vmem:[#allocation2 + $0x18] sm:$0xff]
    %v137 = vld [vmem:[#allocation2 + $0x28] sm:$0x3f]
    %v138 = vmul.f32 %v135, 0.13533528
    %v139 = vmul.f32 %v136, 0.13533528
    %v140 = vmul.f32 %v137, 0.13533528
    %v141 = vld [vmem:[#allocation2 + $0x8] sm:$0x80]
    %v142 = vld [vmem:[#allocation2 + $0x28] sm:$0x7f]
    %v143 = vmul.f32 %v141, 0.60653067
    %v144 = vmul.f32 %v136, 0.60653067
    %v145 = vmul.f32 %v142, 0.60653067
    %vm149 = vcmask 1046528
    %v150 = vrot.slane %v143, 1
    %v151 = vrot.slane %v144, 1
    %v152 = vsel %vm149, %v150, %v151
    %v153 = vrot.slane %v145, 1
    %v154 = vsel %vm149, %v151, %v153
    %v158 = vadd.f32 %v138, %v152
    %v159 = vadd.f32 %v139, %v154
    %v160 = vadd.f32 %v140, %v153
    %v161 = vld [vmem:[#allocation2 + $0x28] sm:$0xff]
    %vm164 = vcmask 1045504
    %v165 = vrot.slane %v136, 2
    %v166 = vrot.slane %v161, 2
    %v167 = vsel %vm164, %v165, %v166
    %v171 = vadd.f32 %v158, %v165
    %v172 = vadd.f32 %v159, %v167
    %v173 = vadd.f32 %v160, %v166
    %v174 = vld [vmem:[#allocation2 + $0x18] sm:$0xfe]
    %v175 = vld [vmem:[#allocation2 + $0x38] sm:$0x1]
    %v176 = vmul.f32 %v174, 0.60653067
    %v177 = vmul.f32 %v161, 0.60653067
    %v178 = vmul.f32 %v175, 0.60653067
    %vm182 = vcmask 1044480
    %v183 = vrot.slane %v176, 3
    %v184 = vrot.slane %v177, 3
    %v185 = vsel %vm182, %v183, %v184
    %v186 = vrot.slane %v178, 3
    %v187 = vsel %vm182, %v184, %v186
    %v191 = vadd.f32 %v171, %v183
    %v192 = vadd.f32 %v172, %v185
    %v193 = vadd.f32 %v173, %v187
    %v194 = vld [vmem:[#allocation2 + $0x18] sm:$0xfc]
    %v195 = vld [vmem:[#allocation2 + $0x38] sm:$0x3]
    %v196 = vmul.f32 %v194, 0.13533528
    %v197 = vmul.f32 %v161, 0.13533528
    %v198 = vmul.f32 %v195, 0.13533528
    %vm202 = vcmask 1043456
    %v203 = vrot.slane %v196, 4
    %v204 = vrot.slane %v197, 4
    %v205 = vsel %vm202, %v203, %v204
    %v206 = vrot.slane %v198, 4
    %v207 = vsel %vm202, %v204, %v206
    %v211 = vadd.f32 %v191, %v203
    %v212 = vadd.f32 %v192, %v205
    %v213 = vadd.f32 %v193, %v207
    %vm214 = vcmask 130054
    %215 = vst.msk [vmem:[#allocation6 - $0x6] sm:$0xc0] %vm214, %v211
    %216 = vst.msk [vmem:[#allocation6 + $0x2] sm:$0xff] %vm44, %v212
    %vm217 = vcmask 128000
    %218 = vst.msk [vmem:[#allocation6 + $0xa] sm:$0x3f] %vm217, %v213
    %vm222 = vcmask 1041408
    %v223 = vrot.slane %v211, 6
    %v224 = vrot.slane %v212, 6
    %v225 = vsel %vm222, %v223, %v224
    %v226 = vrot.slane %v213, 6
    %v227 = vsel %vm222, %v224, %v226
    %230 = vst.msk [vmem:[#allocation2 + $0x18] sm:$0xff] %vm44, %v225
    %231 = vst.msk [vmem:[#allocation2 + $0x28] sm:$0xff] %vm44, %v227
    %v232 = vld [vmem:[#allocation2] sm:$0x80]
    %v233 = vld [vmem:[#allocation2 + $0x8] sm:$0x80]
    %v234 = vld [vmem:[#allocation2 + $0x10] sm:$0xff]
    %v235 = vld [vmem:[#allocation2 + $0x18] sm:$0xff]
    %v236 = vld [vmem:[#allocation2 + $0x20] sm:$0x7f]
    %v237 = vld [vmem:[#allocation2 + $0x28] sm:$0x7f]
    %v238 = vld [vmem:[#allocation2 + $0x20] sm:$0xff]
    %v239 = vld [vmem:[#allocation2 + $0x28] sm:$0xff]
    %v240 = vld [vmem:[#allocation2 + $0x10] sm:$0xfe]
    %v241 = vld [vmem:[#allocation2 + $0x18] sm:$0xfe]
    %v242 = vld [vmem:[#allocation2 + $0x30] sm:$0x1]
    %v243 = vld [vmem:[#allocation2 + $0x38] sm:$0x1]
    %v244 = vmul.f32 %v234, 2.0
    %v245 = vmul.f32 %v235, 2.0
    %v246 = vmul.f32 %v238, 2.0
    %v247 = vmul.f32 %v239, 2.0
    %v252 = vrot.slane %v244, 1
    %v253 = vrot.slane %v245, 1
    %v254 = vrot.slane %v246, 1
    %v255 = vsel %vm149, %v252, %v254
    %v256 = vrot.slane %v247, 1
    %v257 = vsel %vm149, %v253, %v256
    %v264 = vadd.f32 %v232, %v252
    %v265 = vadd.f32 %v233, %v253
    %v266 = vadd.f32 %v234, %v255
    %v267 = vadd.f32 %v235, %v257
    %v268 = vadd.f32 %v236, %v254
    %v269 = vadd.f32 %v237, %v256
    %v276 = vrot.slane %v240, 2
    %v277 = vrot.slane %v241, 2
    %v278 = vrot.slane %v238, 2
    %v279 = vsel %vm164, %v276, %v278
    %v280 = vrot.slane %v239, 2
    %v281 = vsel %vm164, %v277, %v280
    %v282 = vrot.slane %v242, 2
    %v283 = vsel %vm164, %v278, %v282
    %v284 = vrot.slane %v243, 2
    %v285 = vsel %vm164, %v280, %v284
    %v292 = vadd.f32 %v264, %v276
    %v293 = vadd.f32 %v265, %v277
    %v294 = vadd.f32 %v266, %v279
    %v295 = vadd.f32 %v267, %v281
    %v296 = vadd.f32 %v268, %v283
    %v297 = vadd.f32 %v269, %v285
    %301 = vrot.lane.b32.xlu0 %v293, 126
    %v302 = vpop.permute.xlu0 %301
    %303 = vrot.lane.b32.xlu0 %v295, 126
    %v304 = vpop.permute.xlu0 %303
    %305 = vrot.lane.b32.xlu0 %v297, 126
    %v306 = vpop.permute.xlu0 %305
    %v310 = vsub.f32 %v292, %v302
    %v311 = vsub.f32 %v293, %v302
    %v312 = vsub.f32 %v294, %v304
    %v313 = vsub.f32 %v295, %v304
    %v314 = vsub.f32 %v296, %v306
    %v315 = vsub.f32 %v297, %v306
    %v316 = vmul.f32 %v233, 2.0
    %v317 = vmul.f32 %v237, 2.0
    %320 = vrot.lane.b32.xlu0 %v316, 127
    %v321 = vpop.permute.xlu0 %320
    %322 = vrot.lane.b32.xlu0 %v245, 127
    %v323 = vpop.permute.xlu0 %322
    %324 = vrot.lane.b32.xlu0 %v317, 127
    %v325 = vpop.permute.xlu0 %324
    %v329 = vadd.f32 %v232, %v321
    %v330 = vadd.f32 %v233, %v321
    %v331 = vadd.f32 %v234, %v323
    %v332 = vadd.f32 %v235, %v323
    %v333 = vadd.f32 %v236, %v325
    %v334 = vadd.f32 %v237, %v325
    %338 = vrot.lane.b32.xlu0 %v233, 126
    %v339 = vpop.permute.xlu0 %338
    %340 = vrot.lane.b32.xlu0 %v235, 126
    %v341 = vpop.permute.xlu0 %340
    %342 = vrot.lane.b32.xlu0 %v237, 126
    %v343 = vpop.permute.xlu0 %342
    %v347 = vadd.f32 %v329, %v339
    %v348 = vadd.f32 %v330, %v339
    %v349 = vadd.f32 %v331, %v341
    %v350 = vadd.f32 %v332, %v341
    %v351 = vadd.f32 %v333, %v343
    %v352 = vadd.f32 %v334, %v343
    %v353 = vmul.f32 %v241, 2.0
    %v354 = vmul.f32 %v243, 2.0
    %357 = vrot.lane.b32.xlu0 %v353, 127
    %v358 = vpop.permute.xlu0 %357
    %359 = vrot.lane.b32.xlu0 %v247, 127
    %v360 = vpop.permute.xlu0 %359
    %361 = vrot.lane.b32.xlu0 %v354, 127
    %v362 = vpop.permute.xlu0 %361
    %v366 = vadd.f32 %v240, %v358
    %v367 = vadd.f32 %v241, %v358
    %v368 = vadd.f32 %v238, %v360
    %v369 = vadd.f32 %v239, %v360
    %v370 = vadd.f32 %v242, %v362
    %v371 = vadd.f32 %v243, %v362
    %372 = vrot.lane.b32.xlu0 %v241, 126
    %v373 = vpop.permute.xlu0 %372
    %374 = vrot.lane.b32.xlu0 %v239, 126
    %v375 = vpop.permute.xlu0 %374
    %376 = vrot.lane.b32.xlu0 %v243, 126
    %v377 = vpop.permute.xlu0 %376
    %v381 = vadd.f32 %v366, %v373
    %v382 = vadd.f32 %v367, %v373
    %v383 = vadd.f32 %v368, %v375
    %v384 = vadd.f32 %v369, %v375
    %v385 = vadd.f32 %v370, %v377
    %v386 = vadd.f32 %v371, %v377
    %v393 = vrot.slane %v381, 2
    %v394 = vrot.slane %v382, 2
    %v395 = vrot.slane %v383, 2
    %v396 = vsel %vm164, %v393, %v395
    %v397 = vrot.slane %v384, 2
    %v398 = vsel %vm164, %v394, %v397
    %v399 = vrot.slane %v385, 2
    %v400 = vsel %vm164, %v395, %v399
    %v401 = vrot.slane %v386, 2
    %v402 = vsel %vm164, %v397, %v401
    %v409 = vsub.f32 %v347, %v393
    %v410 = vsub.f32 %v348, %v394
    %v411 = vsub.f32 %v349, %v396
    %v412 = vsub.f32 %v350, %v398
    %v413 = vsub.f32 %v351, %v400
    %v414 = vsub.f32 %v352, %v402
    %v415 = vmul.f32 %v310, %v310
    %v416 = vmul.f32 %v311, %v311
    %v417 = vmul.f32 %v312, %v312
    %v418 = vmul.f32 %v313, %v313
    %v419 = vmul.f32 %v314, %v314
    %v420 = vmul.f32 %v315, %v315
    %v421 = vmul.f32 %v409, %v409
    %v422 = vmul.f32 %v410, %v410
    %v423 = vmul.f32 %v411, %v411
    %v424 = vmul.f32 %v412, %v412
    %v425 = vmul.f32 %v413, %v413
    %v426 = vmul.f32 %v414, %v414
    %v427 = vadd.f32 %v415, %v421
    %v428 = vadd.f32 %v416, %v422
    %v429 = vadd.f32 %v417, %v423
    %v430 = vadd.f32 %v418, %v424
    %v431 = vadd.f32 %v419, %v425
    %v432 = vadd.f32 %v420, %v426
    %v433 = vrsqrt.pop %v427
    %v434 = vmul.f32 %v427, %v433
    %vm435 = vcmp.eq.f32.partialorder %v427, inf
    %v436 = vsel %vm435, %v427, %v434
    %vm437 = vcmp.eq.f32.partialorder %v427, 0.0
    %v438 = vand.u32 %v427, 2147483648
    %v439 = vsel %vm437, %v438, %v436
    %v440 = vrsqrt.pop %v428
    %v441 = vmul.f32 %v428, %v440
    %vm442 = vcmp.eq.f32.partialorder %v428, inf
    %v443 = vsel %vm442, %v428, %v441
    %vm444 = vcmp.eq.f32.partialorder %v428, 0.0
    %v445 = vand.u32 %v428, 2147483648
    %v446 = vsel %vm444, %v445, %v443
    %v447 = vrsqrt.pop %v429
    %v448 = vmul.f32 %v429, %v447
    %vm449 = vcmp.eq.f32.partialorder %v429, inf
    %v450 = vsel %vm449, %v429, %v448
    %vm451 = vcmp.eq.f32.partialorder %v429, 0.0
    %v452 = vand.u32 %v429, 2147483648
    %v453 = vsel %vm451, %v452, %v450
    %v454 = vrsqrt.pop %v430
    %v455 = vmul.f32 %v430, %v454
    %vm456 = vcmp.eq.f32.partialorder %v430, inf
    %v457 = vsel %vm456, %v430, %v455
    %vm458 = vcmp.eq.f32.partialorder %v430, 0.0
    %v459 = vand.u32 %v430, 2147483648
    %v460 = vsel %vm458, %v459, %v457
    %v461 = vrsqrt.pop %v431
    %v462 = vmul.f32 %v431, %v461
    %vm463 = vcmp.eq.f32.partialorder %v431, inf
    %v464 = vsel %vm463, %v431, %v462
    %vm465 = vcmp.eq.f32.partialorder %v431, 0.0
    %v466 = vand.u32 %v431, 2147483648
    %v467 = vsel %vm465, %v466, %v464
    %v468 = vrsqrt.pop %v432
    %v469 = vmul.f32 %v432, %v468
    %vm470 = vcmp.eq.f32.partialorder %v432, inf
    %v471 = vsel %vm470, %v432, %v469
    %vm472 = vcmp.eq.f32.partialorder %v432, 0.0
    %v473 = vand.u32 %v432, 2147483648
    %v474 = vsel %vm472, %v473, %v471
    %s475 = scalar_lea.vmem [#allocation3], 16
    %v476 = vld [vmem:[%s475] sm:$0xff]
    %v477 = vld [vmem:[%s475 + $0x8] sm:$0xff]
    %478 = vst.msk [vmem:[#allocation2 + $0x18] sm:$0xff] %vm44, %v476
    %479 = vst.msk [vmem:[#allocation2 + $0x28] sm:$0xff] %vm44, %v477
    %v480 = vld [vmem:[#allocation2 + $0x10] sm:$0xff]
    %v481 = vld [vmem:[#allocation2 + $0x18] sm:$0xff]
    %v482 = vld [vmem:[#allocation2 + $0x20] sm:$0xff]
    %v483 = vld [vmem:[#allocation2 + $0x28] sm:$0xff]
    %v484 = vmul.f32 %v480, 0.13533528
    %v485 = vmul.f32 %v481, 0.13533528
    %v486 = vmul.f32 %v482, 0.13533528
    %v487 = vmul.f32 %v483, 0.13533528
    %v488 = vmul.f32 %v480, 0.60653067
    %v489 = vmul.f32 %v481, 0.60653067
    %v490 = vmul.f32 %v482, 0.60653067
    %v491 = vmul.f32 %v483, 0.60653067
    %496 = vrot.lane.b32.xlu0 %v488, 127
    %v497 = vpop.permute.xlu0 %496
    %498 = vrot.lane.b32.xlu0 %v489, 127
    %v499 = vpop.permute.xlu0 %498
    %500 = vrot.lane.b32.xlu0 %v490, 127
    %v501 = vpop.permute.xlu0 %500
    %502 = vrot.lane.b32.xlu0 %v491, 127
    %v503 = vpop.permute.xlu0 %502
    %v504 = vsel %vm71, %v497, %v499
    %v505 = vsel %vm71, %v501, %v503
    %v510 = vadd.f32 %v484, %v504
    %v511 = vadd.f32 %v485, %v499
    %v512 = vadd.f32 %v486, %v505
    %v513 = vadd.f32 %v487, %v503
    %516 = vrot.lane.b32.xlu0 %v481, 126
    %v517 = vpop.permute.xlu0 %516
    %518 = vrot.lane.b32.xlu0 %v483, 126
    %v519 = vpop.permute.xlu0 %518
    %v522 = vadd.f32 %v510, %v517
    %v523 = vadd.f32 %v511, %v517
    %v524 = vadd.f32 %v512, %v519
    %v525 = vadd.f32 %v513, %v519
    %526 = vrot.lane.b32.xlu0 %v489, 125
    %v527 = vpop.permute.xlu0 %526
    %528 = vrot.lane.b32.xlu0 %v491, 125
    %v529 = vpop.permute.xlu0 %528
    %v532 = vadd.f32 %v522, %v527
    %v533 = vadd.f32 %v523, %v527
    %v534 = vadd.f32 %v524, %v529
    %v535 = vadd.f32 %v525, %v529
    %538 = vrot.lane.b32.xlu0 %v485, 124
    %v539 = vpop.permute.xlu0 %538
    %540 = vrot.lane.b32.xlu0 %v487, 124
    %v541 = vpop.permute.xlu0 %540
    %v544 = vadd.f32 %v532, %v539
    %v545 = vadd.f32 %v533, %v539
    %v546 = vadd.f32 %v534, %v541
    %v547 = vadd.f32 %v535, %v541
    %552 = vrot.lane.b32.xlu0 %v544, 2
    %v553 = vpop.permute.xlu0 %552
    %554 = vrot.lane.b32.xlu0 %v545, 2
    %v555 = vpop.permute.xlu0 %554
    %556 = vrot.lane.b32.xlu0 %v546, 2
    %v557 = vpop.permute.xlu0 %556
    %558 = vrot.lane.b32.xlu0 %v547, 2
    %v559 = vpop.permute.xlu0 %558
    %v560 = vsel %vm128, %v553, %v555
    %v561 = vsel %vm128, %v557, %v559
    %564 = vst.msk [vmem:[#allocation2 + $0x18] sm:$0xff] %vm44, %v560
    %565 = vst.msk [vmem:[#allocation2 + $0x28] sm:$0xff] %vm44, %v561
    %v566 = vld [vmem:[#allocation2 + $0x8] sm:$0xc0]
    %v567 = vld [vmem:[#allocation2 + $0x18] sm:$0xff]
    %v568 = vld [vmem:[#allocation2 + $0x28] sm:$0x3f]
    %v569 = vmul.f32 %v566, 0.13533528
    %v570 = vmul.f32 %v567, 0.13533528
    %v571 = vmul.f32 %v568, 0.13533528
    %v572 = vld [vmem:[#allocation2 + $0x8] sm:$0x80]
    %v573 = vld [vmem:[#allocation2 + $0x28] sm:$0x7f]
    %v574 = vmul.f32 %v572, 0.60653067
    %v575 = vmul.f32 %v567, 0.60653067
    %v576 = vmul.f32 %v573, 0.60653067
    %v580 = vrot.slane %v574, 1
    %v581 = vrot.slane %v575, 1
    %v582 = vsel %vm149, %v580, %v581
    %v583 = vrot.slane %v576, 1
    %v584 = vsel %vm149, %v581, %v583
    %v588 = vadd.f32 %v569, %v582
    %v589 = vadd.f32 %v570, %v584
    %v590 = vadd.f32 %v571, %v583
    %v591 = vld [vmem:[#allocation2 + $0x28] sm:$0xff]
    %v594 = vrot.slane %v567, 2
    %v595 = vrot.slane %v591, 2
    %v596 = vsel %vm164, %v594, %v595
    %v600 = vadd.f32 %v588, %v594
    %v601 = vadd.f32 %v589, %v596
    %v602 = vadd.f32 %v590, %v595
    %v603 = vld [vmem:[#allocation2 + $0x18] sm:$0xfe]
    %v604 = vld [vmem:[#allocation2 + $0x38] sm:$0x1]
    %v605 = vmul.f32 %v603, 0.60653067
    %v606 = vmul.f32 %v591, 0.60653067
    %v607 = vmul.f32 %v604, 0.60653067
    %v611 = vrot.slane %v605, 3
    %v612 = vrot.slane %v606, 3
    %v613 = vsel %vm182, %v611, %v612
    %v614 = vrot.slane %v607, 3
    %v615 = vsel %vm182, %v612, %v614
    %v619 = vadd.f32 %v600, %v611
    %v620 = vadd.f32 %v601, %v613
    %v621 = vadd.f32 %v602, %v615
    %v622 = vld [vmem:[#allocation2 + $0x18] sm:$0xfc]
    %v623 = vld [vmem:[#allocation2 + $0x38] sm:$0x3]
    %v624 = vmul.f32 %v622, 0.13533528
    %v625 = vmul.f32 %v591, 0.13533528
    %v626 = vmul.f32 %v623, 0.13533528
    %v630 = vrot.slane %v624, 4
    %v631 = vrot.slane %v625, 4
    %v632 = vsel %vm202, %v630, %v631
    %v633 = vrot.slane %v626, 4
    %v634 = vsel %vm202, %v631, %v633
    %v638 = vadd.f32 %v619, %v630
    %v639 = vadd.f32 %v620, %v632
    %v640 = vadd.f32 %v621, %v634
    %s641 = scalar_lea.vmem [#allocation6], 16
    %642 = vst.msk [vmem:[%s641 - $0x6] sm:$0xc0] %vm214, %v638
    %643 = vst.msk [vmem:[%s641 + $0x2] sm:$0xff] %vm44, %v639
    %644 = vst.msk [vmem:[%s641 + $0xa] sm:$0x3f] %vm217, %v640
    %v648 = vrot.slane %v638, 6
    %v649 = vrot.slane %v639, 6
    %v650 = vsel %vm222, %v648, %v649
    %v651 = vrot.slane %v640, 6
    %v652 = vsel %vm222, %v649, %v651
    %655 = vst.msk [vmem:[#allocation2 + $0x18] sm:$0xff] %vm44, %v650
    %656 = vst.msk [vmem:[#allocation2 + $0x28] sm:$0xff] %vm44, %v652
    %v657 = vld [vmem:[#allocation2] sm:$0x80]
    %v658 = vld [vmem:[#allocation2 + $0x8] sm:$0x80]
    %v659 = vld [vmem:[#allocation2 + $0x10] sm:$0xff]
    %v660 = vld [vmem:[#allocation2 + $0x18] sm:$0xff]
    %v661 = vld [vmem:[#allocation2 + $0x20] sm:$0x7f]
    %v662 = vld [vmem:[#allocation2 + $0x28] sm:$0x7f]
    %v663 = vld [vmem:[#allocation2 + $0x20] sm:$0xff]
    %v664 = vld [vmem:[#allocation2 + $0x28] sm:$0xff]
    %v665 = vld [vmem:[#allocation2 + $0x10] sm:$0xfe]
    %v666 = vld [vmem:[#allocation2 + $0x18] sm:$0xfe]
    %v667 = vld [vmem:[#allocation2 + $0x30] sm:$0x1]
    %v668 = vld [vmem:[#allocation2 + $0x38] sm:$0x1]
    %v669 = vmul.f32 %v659, 2.0
    %v670 = vmul.f32 %v660, 2.0
    %v671 = vmul.f32 %v663, 2.0
    %v672 = vmul.f32 %v664, 2.0
    %v677 = vrot.slane %v669, 1
    %v678 = vrot.slane %v670, 1
    %v679 = vrot.slane %v671, 1
    %v680 = vsel %vm149, %v677, %v679
    %v681 = vrot.slane %v672, 1
    %v682 = vsel %vm149, %v678, %v681
    %v689 = vadd.f32 %v657, %v677
    %v690 = vadd.f32 %v658, %v678
    %v691 = vadd.f32 %v659, %v680
    %v692 = vadd.f32 %v660, %v682
    %v693 = vadd.f32 %v661, %v679
    %v694 = vadd.f32 %v662, %v681
    %v701 = vrot.slane %v665, 2
    %v702 = vrot.slane %v666, 2
    %v703 = vrot.slane %v663, 2
    %v704 = vsel %vm164, %v701, %v703
    %v705 = vrot.slane %v664, 2
    %v706 = vsel %vm164, %v702, %v705
    %v707 = vrot.slane %v667, 2
    %v708 = vsel %vm164, %v703, %v707
    %v709 = vrot.slane %v668, 2
    %v710 = vsel %vm164, %v705, %v709
    %v717 = vadd.f32 %v689, %v701
    %v718 = vadd.f32 %v690, %v702
    %v719 = vadd.f32 %v691, %v704
    %v720 = vadd.f32 %v692, %v706
    %v721 = vadd.f32 %v693, %v708
    %v722 = vadd.f32 %v694, %v710
    %726 = vrot.lane.b32.xlu0 %v718, 126
    %v727 = vpop.permute.xlu0 %726
    %728 = vrot.lane.b32.xlu0 %v720, 126
    %v729 = vpop.permute.xlu0 %728
    %730 = vrot.lane.b32.xlu0 %v722, 126
    %v731 = vpop.permute.xlu0 %730
    %v735 = vsub.f32 %v717, %v727
    %v736 = vsub.f32 %v718, %v727
    %v737 = vsub.f32 %v719, %v729
    %v738 = vsub.f32 %v720, %v729
    %v739 = vsub.f32 %v721, %v731
    %v740 = vsub.f32 %v722, %v731
    %v741 = vmul.f32 %v658, 2.0
    %v742 = vmul.f32 %v662, 2.0
    %745 = vrot.lane.b32.xlu0 %v741, 127
    %v746 = vpop.permute.xlu0 %745
    %747 = vrot.lane.b32.xlu0 %v670, 127
    %v748 = vpop.permute.xlu0 %747
    %749 = vrot.lane.b32.xlu0 %v742, 127
    %v750 = vpop.permute.xlu0 %749
    %v754 = vadd.f32 %v657, %v746
    %v755 = vadd.f32 %v658, %v746
    %v756 = vadd.f32 %v659, %v748
    %v757 = vadd.f32 %v660, %v748
    %v758 = vadd.f32 %v661, %v750
    %v759 = vadd.f32 %v662, %v750
    %763 = vrot.lane.b32.xlu0 %v658, 126
    %v764 = vpop.permute.xlu0 %763
    %765 = vrot.lane.b32.xlu0 %v660, 126
    %v766 = vpop.permute.xlu0 %765
    %767 = vrot.lane.b32.xlu0 %v662, 126
    %v768 = vpop.permute.xlu0 %767
    %v772 = vadd.f32 %v754, %v764
    %v773 = vadd.f32 %v755, %v764
    %v774 = vadd.f32 %v756, %v766
    %v775 = vadd.f32 %v757, %v766
    %v776 = vadd.f32 %v758, %v768
    %v777 = vadd.f32 %v759, %v768
    %v778 = vmul.f32 %v666, 2.0
    %v779 = vmul.f32 %v668, 2.0
    %782 = vrot.lane.b32.xlu0 %v778, 127
    %v783 = vpop.permute.xlu0 %782
    %784 = vrot.lane.b32.xlu0 %v672, 127
    %v785 = vpop.permute.xlu0 %784
    %786 = vrot.lane.b32.xlu0 %v779, 127
    %v787 = vpop.permute.xlu0 %786
    %v791 = vadd.f32 %v665, %v783
    %v792 = vadd.f32 %v666, %v783
    %v793 = vadd.f32 %v663, %v785
    %v794 = vadd.f32 %v664, %v785
    %v795 = vadd.f32 %v667, %v787
    %v796 = vadd.f32 %v668, %v787
    %797 = vrot.lane.b32.xlu0 %v666, 126
    %v798 = vpop.permute.xlu0 %797
    %799 = vrot.lane.b32.xlu0 %v664, 126
    %v800 = vpop.permute.xlu0 %799
    %801 = vrot.lane.b32.xlu0 %v668, 126
    %v802 = vpop.permute.xlu0 %801
    %v806 = vadd.f32 %v791, %v798
    %v807 = vadd.f32 %v792, %v798
    %v808 = vadd.f32 %v793, %v800
    %v809 = vadd.f32 %v794, %v800
    %v810 = vadd.f32 %v795, %v802
    %v811 = vadd.f32 %v796, %v802
    %v818 = vrot.slane %v806, 2
    %v819 = vrot.slane %v807, 2
    %v820 = vrot.slane %v808, 2
    %v821 = vsel %vm164, %v818, %v820
    %v822 = vrot.slane %v809, 2
    %v823 = vsel %vm164, %v819, %v822
    %v824 = vrot.slane %v810, 2
    %v825 = vsel %vm164, %v820, %v824
    %v826 = vrot.slane %v811, 2
    %v827 = vsel %vm164, %v822, %v826
    %v834 = vsub.f32 %v772, %v818
    %v835 = vsub.f32 %v773, %v819
    %v836 = vsub.f32 %v774, %v821
    %v837 = vsub.f32 %v775, %v823
    %v838 = vsub.f32 %v776, %v825
    %v839 = vsub.f32 %v777, %v827
    %v840 = vmul.f32 %v735, %v735
    %v841 = vmul.f32 %v736, %v736
    %v842 = vmul.f32 %v737, %v737
    %v843 = vmul.f32 %v738, %v738
    %v844 = vmul.f32 %v739, %v739
    %v845 = vmul.f32 %v740, %v740
    %v846 = vmul.f32 %v834, %v834
    %v847 = vmul.f32 %v835, %v835
    %v848 = vmul.f32 %v836, %v836
    %v849 = vmul.f32 %v837, %v837
    %v850 = vmul.f32 %v838, %v838
    %v851 = vmul.f32 %v839, %v839
    %v852 = vadd.f32 %v840, %v846
    %v853 = vadd.f32 %v841, %v847
    %v854 = vadd.f32 %v842, %v848
    %v855 = vadd.f32 %v843, %v849
    %v856 = vadd.f32 %v844, %v850
    %v857 = vadd.f32 %v845, %v851
    %v858 = vrsqrt.pop %v852
    %v859 = vmul.f32 %v852, %v858
    %vm860 = vcmp.eq.f32.partialorder %v852, inf
    %v861 = vsel %vm860, %v852, %v859
    %vm862 = vcmp.eq.f32.partialorder %v852, 0.0
    %v863 = vand.u32 %v852, 2147483648
    %v864 = vsel %vm862, %v863, %v861
    %v865 = vrsqrt.pop %v853
    %v866 = vmul.f32 %v853, %v865
    %vm867 = vcmp.eq.f32.partialorder %v853, inf
    %v868 = vsel %vm867, %v853, %v866
    %vm869 = vcmp.eq.f32.partialorder %v853, 0.0
    %v870 = vand.u32 %v853, 2147483648
    %v871 = vsel %vm869, %v870, %v868
    %v872 = vrsqrt.pop %v854
    %v873 = vmul.f32 %v854, %v872
    %vm874 = vcmp.eq.f32.partialorder %v854, inf
    %v875 = vsel %vm874, %v854, %v873
    %vm876 = vcmp.eq.f32.partialorder %v854, 0.0
    %v877 = vand.u32 %v854, 2147483648
    %v878 = vsel %vm876, %v877, %v875
    %v879 = vrsqrt.pop %v855
    %v880 = vmul.f32 %v855, %v879
    %vm881 = vcmp.eq.f32.partialorder %v855, inf
    %v882 = vsel %vm881, %v855, %v880
    %vm883 = vcmp.eq.f32.partialorder %v855, 0.0
    %v884 = vand.u32 %v855, 2147483648
    %v885 = vsel %vm883, %v884, %v882
    %v886 = vrsqrt.pop %v856
    %v887 = vmul.f32 %v856, %v886
    %vm888 = vcmp.eq.f32.partialorder %v856, inf
    %v889 = vsel %vm888, %v856, %v887
    %vm890 = vcmp.eq.f32.partialorder %v856, 0.0
    %v891 = vand.u32 %v856, 2147483648
    %v892 = vsel %vm890, %v891, %v889
    %v893 = vrsqrt.pop %v857
    %v894 = vmul.f32 %v857, %v893
    %vm895 = vcmp.eq.f32.partialorder %v857, inf
    %v896 = vsel %vm895, %v857, %v894
    %vm897 = vcmp.eq.f32.partialorder %v857, 0.0
    %v898 = vand.u32 %v857, 2147483648
    %v899 = vsel %vm897, %v898, %v896
    %s900 = scalar_lea.vmem [#allocation3], 32
    %v901 = vld [vmem:[%s900] sm:$0xff]
    %v902 = vld [vmem:[%s900 + $0x8] sm:$0xff]
    %903 = vst.msk [vmem:[#allocation2 + $0x18] sm:$0xff] %vm44, %v901
    %904 = vst.msk [vmem:[#allocation2 + $0x28] sm:$0xff] %vm44, %v902
    %v905 = vld [vmem:[#allocation2 + $0x10] sm:$0xff]
    %v906 = vld [vmem:[#allocation2 + $0x18] sm:$0xff]
    %v907 = vld [vmem:[#allocation2 + $0x20] sm:$0xff]
    %v908 = vld [vmem:[#allocation2 + $0x28] sm:$0xff]
    %v909 = vmul.f32 %v905, 0.13533528
    %v910 = vmul.f32 %v906, 0.13533528
    %v911 = vmul.f32 %v907, 0.13533528
    %v912 = vmul.f32 %v908, 0.13533528
    %v913 = vmul.f32 %v905, 0.60653067
    %v914 = vmul.f32 %v906, 0.60653067
    %v915 = vmul.f32 %v907, 0.60653067
    %v916 = vmul.f32 %v908, 0.60653067
    %921 = vrot.lane.b32.xlu0 %v913, 127
    %v922 = vpop.permute.xlu0 %921
    %923 = vrot.lane.b32.xlu0 %v914, 127
    %v924 = vpop.permute.xlu0 %923
    %925 = vrot.lane.b32.xlu0 %v915, 127
    %v926 = vpop.permute.xlu0 %925
    %927 = vrot.lane.b32.xlu0 %v916, 127
    %v928 = vpop.permute.xlu0 %927
    %v929 = vsel %vm71, %v922, %v924
    %v930 = vsel %vm71, %v926, %v928
    %v935 = vadd.f32 %v909, %v929
    %v936 = vadd.f32 %v910, %v924
    %v937 = vadd.f32 %v911, %v930
    %v938 = vadd.f32 %v912, %v928
    %941 = vrot.lane.b32.xlu0 %v906, 126
    %v942 = vpop.permute.xlu0 %941
    %943 = vrot.lane.b32.xlu0 %v908, 126
    %v944 = vpop.permute.xlu0 %943
    %v947 = vadd.f32 %v935, %v942
    %v948 = vadd.f32 %v936, %v942
    %v949 = vadd.f32 %v937, %v944
    %v950 = vadd.f32 %v938, %v944
    %951 = vrot.lane.b32.xlu0 %v914, 125
    %v952 = vpop.permute.xlu0 %951
    %953 = vrot.lane.b32.xlu0 %v916, 125
    %v954 = vpop.permute.xlu0 %953
    %v957 = vadd.f32 %v947, %v952
    %v958 = vadd.f32 %v948, %v952
    %v959 = vadd.f32 %v949, %v954
    %v960 = vadd.f32 %v950, %v954
    %963 = vrot.lane.b32.xlu0 %v910, 124
    %v964 = vpop.permute.xlu0 %963
    %965 = vrot.lane.b32.xlu0 %v912, 124
    %v966 = vpop.permute.xlu0 %965
    %v969 = vadd.f32 %v957, %v964
    %v970 = vadd.f32 %v958, %v964
    %v971 = vadd.f32 %v959, %v966
    %v972 = vadd.f32 %v960, %v966
    %977 = vrot.lane.b32.xlu0 %v969, 2
    %v978 = vpop.permute.xlu0 %977
    %979 = vrot.lane.b32.xlu0 %v970, 2
    %v980 = vpop.permute.xlu0 %979
    %981 = vrot.lane.b32.xlu0 %v971, 2
    %v982 = vpop.permute.xlu0 %981
    %983 = vrot.lane.b32.xlu0 %v972, 2
    %v984 = vpop.permute.xlu0 %983
    %v985 = vsel %vm128, %v978, %v980
    %v986 = vsel %vm128, %v982, %v984
    %989 = vst.msk [vmem:[#allocation2 + $0x18] sm:$0xff] %vm44, %v985
    %990 = vst.msk [vmem:[#allocation2 + $0x28] sm:$0xff] %vm44, %v986
    %v991 = vld [vmem:[#allocation2 + $0x8] sm:$0xc0]
    %v992 = vld [vmem:[#allocation2 + $0x18] sm:$0xff]
    %v993 = vld [vmem:[#allocation2 + $0x28] sm:$0x3f]
    %v994 = vmul.f32 %v991, 0.13533528
    %v995 = vmul.f32 %v992, 0.13533528
    %v996 = vmul.f32 %v993, 0.13533528
    %v997 = vld [vmem:[#allocation2 + $0x8] sm:$0x80]
    %v998 = vld [vmem:[#allocation2 + $0x28] sm:$0x7f]
    %v999 = vmul.f32 %v997, 0.60653067
    %v1000 = vmul.f32 %v992, 0.60653067
    %v1001 = vmul.f32 %v998, 0.60653067
    %v1005 = vrot.slane %v999, 1
    %v1006 = vrot.slane %v1000, 1
    %v1007 = vsel %vm149, %v1005, %v1006
    %v1008 = vrot.slane %v1001, 1
    %v1009 = vsel %vm149, %v1006, %v1008
    %v1013 = vadd.f32 %v994, %v1007
    %v1014 = vadd.f32 %v995, %v1009
    %v1015 = vadd.f32 %v996, %v1008
    %v1016 = vld [vmem:[#allocation2 + $0x28] sm:$0xff]
    %v1019 = vrot.slane %v992, 2
    %v1020 = vrot.slane %v1016, 2
    %v1021 = vsel %vm164, %v1019, %v1020
    %v1025 = vadd.f32 %v1013, %v1019
    %v1026 = vadd.f32 %v1014, %v1021
    %v1027 = vadd.f32 %v1015, %v1020
    %v1028 = vld [vmem:[#allocation2 + $0x18] sm:$0xfe]
    %v1029 = vld [vmem:[#allocation2 + $0x38] sm:$0x1]
    %v1030 = vmul.f32 %v1028, 0.60653067
    %v1031 = vmul.f32 %v1016, 0.60653067
    %v1032 = vmul.f32 %v1029, 0.60653067
    %v1036 = vrot.slane %v1030, 3
    %v1037 = vrot.slane %v1031, 3
    %v1038 = vsel %vm182, %v1036, %v1037
    %v1039 = vrot.slane %v1032, 3
    %v1040 = vsel %vm182, %v1037, %v1039
    %v1044 = vadd.f32 %v1025, %v1036
    %v1045 = vadd.f32 %v1026, %v1038
    %v1046 = vadd.f32 %v1027, %v1040
    %v1047 = vld [vmem:[#allocation2 + $0x18] sm:$0xfc]
    %v1048 = vld [vmem:[#allocation2 + $0x38] sm:$0x3]
    %v1049 = vmul.f32 %v1047, 0.13533528
    %v1050 = vmul.f32 %v1016, 0.13533528
    %v1051 = vmul.f32 %v1048, 0.13533528
    %v1055 = vrot.slane %v1049, 4
    %v1056 = vrot.slane %v1050, 4
    %v1057 = vsel %vm202, %v1055, %v1056
    %v1058 = vrot.slane %v1051, 4
    %v1059 = vsel %vm202, %v1056, %v1058
    %v1063 = vadd.f32 %v1044, %v1055
    %v1064 = vadd.f32 %v1045, %v1057
    %v1065 = vadd.f32 %v1046, %v1059
    %s1066 = scalar_lea.vmem [#allocation6], 32
    %1067 = vst.msk [vmem:[%s1066 - $0x6] sm:$0xc0] %vm214, %v1063
    %1068 = vst.msk [vmem:[%s1066 + $0x2] sm:$0xff] %vm44, %v1064
    %1069 = vst.msk [vmem:[%s1066 + $0xa] sm:$0x3f] %vm217, %v1065
    %v1073 = vrot.slane %v1063, 6
    %v1074 = vrot.slane %v1064, 6
    %v1075 = vsel %vm222, %v1073, %v1074
    %v1076 = vrot.slane %v1065, 6
    %v1077 = vsel %vm222, %v1074, %v1076
    %1080 = vst.msk [vmem:[#allocation2 + $0x18] sm:$0xff] %vm44, %v1075
    %1081 = vst.msk [vmem:[#allocation2 + $0x28] sm:$0xff] %vm44, %v1077
    %v1082 = vld [vmem:[#allocation2] sm:$0x80]
    %v1083 = vld [vmem:[#allocation2 + $0x8] sm:$0x80]
    %v1084 = vld [vmem:[#allocation2 + $0x10] sm:$0xff]
    %v1085 = vld [vmem:[#allocation2 + $0x18] sm:$0xff]
    %v1086 = vld [vmem:[#allocation2 + $0x20] sm:$0x7f]
    %v1087 = vld [vmem:[#allocation2 + $0x28] sm:$0x7f]
    %v1088 = vld [vmem:[#allocation2 + $0x20] sm:$0xff]
    %v1089 = vld [vmem:[#allocation2 + $0x28] sm:$0xff]
    %v1090 = vld [vmem:[#allocation2 + $0x10] sm:$0xfe]
    %v1091 = vld [vmem:[#allocation2 + $0x18] sm:$0xfe]
    %v1092 = vld [vmem:[#allocation2 + $0x30] sm:$0x1]
    %v1093 = vld [vmem:[#allocation2 + $0x38] sm:$0x1]
    %v1094 = vmul.f32 %v1084, 2.0
    %v1095 = vmul.f32 %v1085, 2.0
    %v1096 = vmul.f32 %v1088, 2.0
    %v1097 = vmul.f32 %v1089, 2.0
    %v1102 = vrot.slane %v1094, 1
    %v1103 = vrot.slane %v1095, 1
    %v1104 = vrot.slane %v1096, 1
    %v1105 = vsel %vm149, %v1102, %v1104
    %v1106 = vrot.slane %v1097, 1
    %v1107 = vsel %vm149, %v1103, %v1106
    %v1114 = vadd.f32 %v1082, %v1102
    %v1115 = vadd.f32 %v1083, %v1103
    %v1116 = vadd.f32 %v1084, %v1105
    %v1117 = vadd.f32 %v1085, %v1107
    %v1118 = vadd.f32 %v1086, %v1104
    %v1119 = vadd.f32 %v1087, %v1106
    %v1126 = vrot.slane %v1090, 2
    %v1127 = vrot.slane %v1091, 2
    %v1128 = vrot.slane %v1088, 2
    %v1129 = vsel %vm164, %v1126, %v1128
    %v1130 = vrot.slane %v1089, 2
    %v1131 = vsel %vm164, %v1127, %v1130
    %v1132 = vrot.slane %v1092, 2
    %v1133 = vsel %vm164, %v1128, %v1132
    %v1134 = vrot.slane %v1093, 2
    %v1135 = vsel %vm164, %v1130, %v1134
    %v1142 = vadd.f32 %v1114, %v1126
    %v1143 = vadd.f32 %v1115, %v1127
    %v1144 = vadd.f32 %v1116, %v1129
    %v1145 = vadd.f32 %v1117, %v1131
    %v1146 = vadd.f32 %v1118, %v1133
    %v1147 = vadd.f32 %v1119, %v1135
    %1151 = vrot.lane.b32.xlu0 %v1143, 126
    %v1152 = vpop.permute.xlu0 %1151
    %1153 = vrot.lane.b32.xlu0 %v1145, 126
    %v1154 = vpop.permute.xlu0 %1153
    %1155 = vrot.lane.b32.xlu0 %v1147, 126
    %v1156 = vpop.permute.xlu0 %1155
    %v1160 = vsub.f32 %v1142, %v1152
    %v1161 = vsub.f32 %v1143, %v1152
    %v1162 = vsub.f32 %v1144, %v1154
    %v1163 = vsub.f32 %v1145, %v1154
    %v1164 = vsub.f32 %v1146, %v1156
    %v1165 = vsub.f32 %v1147, %v1156
    %v1166 = vmul.f32 %v1083, 2.0
    %v1167 = vmul.f32 %v1087, 2.0
    %1170 = vrot.lane.b32.xlu0 %v1166, 127
    %v1171 = vpop.permute.xlu0 %1170
    %1172 = vrot.lane.b32.xlu0 %v1095, 127
    %v1173 = vpop.permute.xlu0 %1172
    %1174 = vrot.lane.b32.xlu0 %v1167, 127
    %v1175 = vpop.permute.xlu0 %1174
    %v1179 = vadd.f32 %v1082, %v1171
    %v1180 = vadd.f32 %v1083, %v1171
    %v1181 = vadd.f32 %v1084, %v1173
    %v1182 = vadd.f32 %v1085, %v1173
    %v1183 = vadd.f32 %v1086, %v1175
    %v1184 = vadd.f32 %v1087, %v1175
    %1188 = vrot.lane.b32.xlu0 %v1083, 126
    %v1189 = vpop.permute.xlu0 %1188
    %1190 = vrot.lane.b32.xlu0 %v1085, 126
    %v1191 = vpop.permute.xlu0 %1190
    %1192 = vrot.lane.b32.xlu0 %v1087, 126
    %v1193 = vpop.permute.xlu0 %1192
    %v1197 = vadd.f32 %v1179, %v1189
    %v1198 = vadd.f32 %v1180, %v1189
    %v1199 = vadd.f32 %v1181, %v1191
    %v1200 = vadd.f32 %v1182, %v1191
    %v1201 = vadd.f32 %v1183, %v1193
    %v1202 = vadd.f32 %v1184, %v1193
    %v1203 = vmul.f32 %v1091, 2.0
    %v1204 = vmul.f32 %v1093, 2.0
    %1207 = vrot.lane.b32.xlu0 %v1203, 127
    %v1208 = vpop.permute.xlu0 %1207
    %1209 = vrot.lane.b32.xlu0 %v1097, 127
    %v1210 = vpop.permute.xlu0 %1209
    %1211 = vrot.lane.b32.xlu0 %v1204, 127
    %v1212 = vpop.permute.xlu0 %1211
    %v1216 = vadd.f32 %v1090, %v1208
    %v1217 = vadd.f32 %v1091, %v1208
    %v1218 = vadd.f32 %v1088, %v1210
    %v1219 = vadd.f32 %v1089, %v1210
    %v1220 = vadd.f32 %v1092, %v1212
    %v1221 = vadd.f32 %v1093, %v1212
    %1222 = vrot.lane.b32.xlu0 %v1091, 126
    %v1223 = vpop.permute.xlu0 %1222
    %1224 = vrot.lane.b32.xlu0 %v1089, 126
    %v1225 = vpop.permute.xlu0 %1224
    %1226 = vrot.lane.b32.xlu0 %v1093, 126
    %v1227 = vpop.permute.xlu0 %1226
    %v1231 = vadd.f32 %v1216, %v1223
    %v1232 = vadd.f32 %v1217, %v1223
    %v1233 = vadd.f32 %v1218, %v1225
    %v1234 = vadd.f32 %v1219, %v1225
    %v1235 = vadd.f32 %v1220, %v1227
    %v1236 = vadd.f32 %v1221, %v1227
    %v1243 = vrot.slane %v1231, 2
    %v1244 = vrot.slane %v1232, 2
    %v1245 = vrot.slane %v1233, 2
    %v1246 = vsel %vm164, %v1243, %v1245
    %v1247 = vrot.slane %v1234, 2
    %v1248 = vsel %vm164, %v1244, %v1247
    %v1249 = vrot.slane %v1235, 2
    %v1250 = vsel %vm164, %v1245, %v1249
    %v1251 = vrot.slane %v1236, 2
    %v1252 = vsel %vm164, %v1247, %v1251
    %v1259 = vsub.f32 %v1197, %v1243
    %v1260 = vsub.f32 %v1198, %v1244
    %v1261 = vsub.f32 %v1199, %v1246
    %v1262 = vsub.f32 %v1200, %v1248
    %v1263 = vsub.f32 %v1201, %v1250
    %v1264 = vsub.f32 %v1202, %v1252
    %v1265 = vmul.f32 %v1160, %v1160
    %v1266 = vmul.f32 %v1161, %v1161
    %v1267 = vmul.f32 %v1162, %v1162
    %v1268 = vmul.f32 %v1163, %v1163
    %v1269 = vmul.f32 %v1164, %v1164
    %v1270 = vmul.f32 %v1165, %v1165
    %v1271 = vmul.f32 %v1259, %v1259
    %v1272 = vmul.f32 %v1260, %v1260
    %v1273 = vmul.f32 %v1261, %v1261
    %v1274 = vmul.f32 %v1262, %v1262
    %v1275 = vmul.f32 %v1263, %v1263
    %v1276 = vmul.f32 %v1264, %v1264
    %v1277 = vadd.f32 %v1265, %v1271
    %v1278 = vadd.f32 %v1266, %v1272
    %v1279 = vadd.f32 %v1267, %v1273
    %v1280 = vadd.f32 %v1268, %v1274
    %v1281 = vadd.f32 %v1269, %v1275
    %v1282 = vadd.f32 %v1270, %v1276
    %v1283 = vrsqrt.pop %v1277
    %v1284 = vmul.f32 %v1277, %v1283
    %vm1285 = vcmp.eq.f32.partialorder %v1277, inf
    %v1286 = vsel %vm1285, %v1277, %v1284
    %vm1287 = vcmp.eq.f32.partialorder %v1277, 0.0
    %v1288 = vand.u32 %v1277, 2147483648
    %v1289 = vsel %vm1287, %v1288, %v1286
    %v1290 = vrsqrt.pop %v1278
    %v1291 = vmul.f32 %v1278, %v1290
    %vm1292 = vcmp.eq.f32.partialorder %v1278, inf
    %v1293 = vsel %vm1292, %v1278, %v1291
    %vm1294 = vcmp.eq.f32.partialorder %v1278, 0.0
    %v1295 = vand.u32 %v1278, 2147483648
    %v1296 = vsel %vm1294, %v1295, %v1293
    %v1297 = vrsqrt.pop %v1279
    %v1298 = vmul.f32 %v1279, %v1297
    %vm1299 = vcmp.eq.f32.partialorder %v1279, inf
    %v1300 = vsel %vm1299, %v1279, %v1298
    %vm1301 = vcmp.eq.f32.partialorder %v1279, 0.0
    %v1302 = vand.u32 %v1279, 2147483648
    %v1303 = vsel %vm1301, %v1302, %v1300
    %v1304 = vrsqrt.pop %v1280
    %v1305 = vmul.f32 %v1280, %v1304
    %vm1306 = vcmp.eq.f32.partialorder %v1280, inf
    %v1307 = vsel %vm1306, %v1280, %v1305
    %vm1308 = vcmp.eq.f32.partialorder %v1280, 0.0
    %v1309 = vand.u32 %v1280, 2147483648
    %v1310 = vsel %vm1308, %v1309, %v1307
    %v1311 = vrsqrt.pop %v1281
    %v1312 = vmul.f32 %v1281, %v1311
    %vm1313 = vcmp.eq.f32.partialorder %v1281, inf
    %v1314 = vsel %vm1313, %v1281, %v1312
    %vm1315 = vcmp.eq.f32.partialorder %v1281, 0.0
    %v1316 = vand.u32 %v1281, 2147483648
    %v1317 = vsel %vm1315, %v1316, %v1314
    %v1318 = vrsqrt.pop %v1282
    %v1319 = vmul.f32 %v1282, %v1318
    %vm1320 = vcmp.eq.f32.partialorder %v1282, inf
    %v1321 = vsel %vm1320, %v1282, %v1319
    %vm1322 = vcmp.eq.f32.partialorder %v1282, 0.0
    %v1323 = vand.u32 %v1282, 2147483648
    %v1324 = vsel %vm1322, %v1323, %v1321
    %v1325 = vadd.f32 %v439, %v864
    %v1326 = vadd.f32 %v446, %v871
    %v1327 = vadd.f32 %v453, %v878
    %v1328 = vadd.f32 %v460, %v885
    %v1329 = vadd.f32 %v467, %v892
    %v1330 = vadd.f32 %v474, %v899
    %v1331 = vadd.f32 %v1325, %v1289
    %v1332 = vadd.f32 %v1326, %v1296
    %v1333 = vadd.f32 %v1327, %v1303
    %v1334 = vadd.f32 %v1328, %v1310
    %v1335 = vadd.f32 %v1329, %v1317
    %v1336 = vadd.f32 %v1330, %v1324
    %v1337 = vadd.f32 %v310, %v735
    %v1338 = vadd.f32 %v311, %v736
    %v1339 = vadd.f32 %v312, %v737
    %v1340 = vadd.f32 %v313, %v738
    %v1341 = vadd.f32 %v314, %v739
    %v1342 = vadd.f32 %v315, %v740
    %v1343 = vadd.f32 %v1337, %v1160
    %v1344 = vadd.f32 %v1338, %v1161
    %v1345 = vadd.f32 %v1339, %v1162
    %v1346 = vadd.f32 %v1340, %v1163
    %v1347 = vadd.f32 %v1341, %v1164
    %v1348 = vadd.f32 %v1342, %v1165
    %v1349 = vadd.f32 %v409, %v834
    %v1350 = vadd.f32 %v410, %v835
    %v1351 = vadd.f32 %v411, %v836
    %v1352 = vadd.f32 %v412, %v837
    %v1353 = vadd.f32 %v413, %v838
    %v1354 = vadd.f32 %v414, %v839
    %v1355 = vadd.f32 %v1349, %v1259
    %v1356 = vadd.f32 %v1350, %v1260
    %v1357 = vadd.f32 %v1351, %v1261
    %v1358 = vadd.f32 %v1352, %v1262
    %v1359 = vadd.f32 %v1353, %v1263
    %v1360 = vadd.f32 %v1354, %v1264
    %1367 = vrot.lane.b32.xlu0 %v1331, 1
    %v1368 = vpop.permute.xlu0 %1367
    %1369 = vrot.lane.b32.xlu0 %v1332, 1
    %v1370 = vpop.permute.xlu0 %1369
    %1371 = vrot.lane.b32.xlu0 %v1333, 1
    %v1372 = vpop.permute.xlu0 %1371
    %1373 = vrot.lane.b32.xlu0 %v1334, 1
    %v1374 = vpop.permute.xlu0 %1373
    %1375 = vrot.lane.b32.xlu0 %v1335, 1
    %v1376 = vpop.permute.xlu0 %1375
    %1377 = vrot.lane.b32.xlu0 %v1336, 1
    %v1378 = vpop.permute.xlu0 %1377
    %vm1379 = vcmask 7168
    %v1380 = vsel %vm1379, %v1368, %v1370
    %v1381 = vsel %vm1379, %v1372, %v1374
    %v1382 = vsel %vm1379, %v1376, %v1378
    %vm1386 = vcmask 130055
    %1387 = vst.msk [vmem:[#allocation7 - $0x7] sm:$0x80] %vm1386, %v1380
    %1388 = vst.msk [vmem:[#allocation7 + $0x1] sm:$0xff] %vm44, %v1381
    %vm1389 = vcmask 129024
    %1390 = vst.msk [vmem:[#allocation7 + $0x9] sm:$0x7f] %vm1389, %v1382
    %vm1391 = vcmp.lt.f32.partialorder %v1331, 10.0
    %vm1392 = vcmp.lt.f32.partialorder %v1332, 10.0
    %vm1393 = vcmp.lt.f32.partialorder %v1333, 10.0
    %vm1394 = vcmp.lt.f32.partialorder %v1334, 10.0
    %vm1395 = vcmp.lt.f32.partialorder %v1335, 10.0
    %vm1396 = vcmp.lt.f32.partialorder %v1336, 10.0
    %v1397 = vsel %vm1391, 0.0, %v1331
    %v1398 = vsel %vm1392, 0.0, %v1332
    %v1399 = vsel %vm1393, 0.0, %v1333
    %v1400 = vsel %vm1394, 0.0, %v1334
    %v1401 = vsel %vm1395, 0.0, %v1335
    %v1402 = vsel %vm1396, 0.0, %v1336
    %1409 = vrot.lane.b32.xlu0 %v1397, 1
    %v1410 = vpop.permute.xlu0 %1409
    %1411 = vrot.lane.b32.xlu0 %v1398, 1
    %v1412 = vpop.permute.xlu0 %1411
    %1413 = vrot.lane.b32.xlu0 %v1399, 1
    %v1414 = vpop.permute.xlu0 %1413
    %1415 = vrot.lane.b32.xlu0 %v1400, 1
    %v1416 = vpop.permute.xlu0 %1415
    %1417 = vrot.lane.b32.xlu0 %v1401, 1
    %v1418 = vpop.permute.xlu0 %1417
    %1419 = vrot.lane.b32.xlu0 %v1402, 1
    %v1420 = vpop.permute.xlu0 %1419
    %v1421 = vsel %vm1379, %v1410, %v1412
    %v1422 = vsel %vm1379, %v1414, %v1416
    %v1423 = vsel %vm1379, %v1418, %v1420
    %1427 = vst.msk [vmem:[#allocation13 - $0x7] sm:$0x80] %vm1386, %v1421
    %1428 = vst.msk [vmem:[#allocation13 + $0x1] sm:$0xff] %vm44, %v1422
    %1429 = vst.msk [vmem:[#allocation13 + $0x9] sm:$0x7f] %vm1389, %v1423
    %v1430 = vmul.f32 %v1343, %v1343
    %v1431 = vmul.f32 %v1344, %v1344
    %v1432 = vmul.f32 %v1345, %v1345
    %v1433 = vmul.f32 %v1346, %v1346
    %v1434 = vmul.f32 %v1347, %v1347
    %v1435 = vmul.f32 %v1348, %v1348
    %v1436 = vmul.f32 %v1355, %v1355
    %v1437 = vmul.f32 %v1356, %v1356
    %v1438 = vmul.f32 %v1357, %v1357
    %v1439 = vmul.f32 %v1358, %v1358
    %v1440 = vmul.f32 %v1359, %v1359
    %v1441 = vmul.f32 %v1360, %v1360
    %v1442 = vadd.f32 %v1430, %v1436
    %v1443 = vadd.f32 %v1431, %v1437
    %v1444 = vadd.f32 %v1432, %v1438
    %v1445 = vadd.f32 %v1433, %v1439
    %v1446 = vadd.f32 %v1434, %v1440
    %v1447 = vadd.f32 %v1435, %v1441
    %vm1448 = vcmp.lt.f32.partialorder %v1343, 0.0
    %vm1449 = vcmp.lt.f32.partialorder %v1344, 0.0
    %vm1450 = vcmp.lt.f32.partialorder %v1345, 0.0
    %vm1451 = vcmp.lt.f32.partialorder %v1346, 0.0
    %vm1452 = vcmp.lt.f32.partialorder %v1347, 0.0
    %vm1453 = vcmp.lt.f32.partialorder %v1348, 0.0
    %v1454 = vmul.f32 %v1442, 0.85355365
    %v1455 = vmul.f32 %v1443, 0.85355365
    %v1456 = vmul.f32 %v1444, 0.85355365
    %v1457 = vmul.f32 %v1445, 0.85355365
    %v1458 = vmul.f32 %v1446, 0.85355365
    %v1459 = vmul.f32 %v1447, 0.85355365
    %vm1460 = vcmp.lt.f32.partialorder %v1430, %v1454
    %vm1461 = vcmp.lt.f32.partialorder %v1431, %v1455
    %vm1462 = vcmp.lt.f32.partialorder %v1432, %v1456
    %vm1463 = vcmp.lt.f32.partialorder %v1433, %v1457
    %vm1464 = vcmp.lt.f32.partialorder %v1434, %v1458
    %vm1465 = vcmp.lt.f32.partialorder %v1435, %v1459
    %vm1466 = vmor %vm1448, %vm1460
    %vm1467 = vmor %vm1449, %vm1461
    %vm1468 = vmor %vm1450, %vm1462
    %vm1469 = vmor %vm1451, %vm1463
    %vm1470 = vmor %vm1452, %vm1464
    %vm1471 = vmor %vm1453, %vm1465
    %v1472 = vmul.f32 %v1442, 0.14644732
    %v1473 = vmul.f32 %v1443, 0.14644732
    %v1474 = vmul.f32 %v1444, 0.14644732
    %v1475 = vmul.f32 %v1445, 0.14644732
    %v1476 = vmul.f32 %v1446, 0.14644732
    %v1477 = vmul.f32 %v1447, 0.14644732
    %vm1478 = vcmp.lt.f32.partialorder %v1430, %v1472
    %vm1479 = vcmp.lt.f32.partialorder %v1431, %v1473
    %vm1480 = vcmp.lt.f32.partialorder %v1432, %v1474
    %vm1481 = vcmp.lt.f32.partialorder %v1433, %v1475
    %vm1482 = vcmp.lt.f32.partialorder %v1434, %v1476
    %vm1483 = vcmp.lt.f32.partialorder %v1435, %v1477
    %vm1484 = vmor %vm1448, %vm1478
    %vm1485 = vmor %vm1449, %vm1479
    %vm1486 = vmor %vm1450, %vm1480
    %vm1487 = vmor %vm1451, %vm1481
    %vm1488 = vmor %vm1452, %vm1482
    %vm1489 = vmor %vm1453, %vm1483
    %v1490 = vmul.f32 %v1442, 0.14644544
    %v1491 = vmul.f32 %v1443, 0.14644544
    %v1492 = vmul.f32 %v1444, 0.14644544
    %v1493 = vmul.f32 %v1445, 0.14644544
    %v1494 = vmul.f32 %v1446, 0.14644544
    %v1495 = vmul.f32 %v1447, 0.14644544
    %vm1496 = vcmp.gt.f32.partialorder %v1430, %v1490
    %vm1497 = vcmp.gt.f32.partialorder %v1431, %v1491
    %vm1498 = vcmp.gt.f32.partialorder %v1432, %v1492
    %vm1499 = vcmp.gt.f32.partialorder %v1433, %v1493
    %vm1500 = vcmp.gt.f32.partialorder %v1434, %v1494
    %vm1501 = vcmp.gt.f32.partialorder %v1435, %v1495
    %vm1502 = vmand %vm1448, %vm1496
    %vm1503 = vmand %vm1449, %vm1497
    %vm1504 = vmand %vm1450, %vm1498
    %vm1505 = vmand %vm1451, %vm1499
    %vm1506 = vmand %vm1452, %vm1500
    %vm1507 = vmand %vm1453, %vm1501
    %v1508 = vmul.f32 %v1442, 0.85355175
    %v1509 = vmul.f32 %v1443, 0.85355175
    %v1510 = vmul.f32 %v1444, 0.85355175
    %v1511 = vmul.f32 %v1445, 0.85355175
    %v1512 = vmul.f32 %v1446, 0.85355175
    %v1513 = vmul.f32 %v1447, 0.85355175
    %vm1514 = vcmp.gt.f32.partialorder %v1430, %v1508
    %vm1515 = vcmp.gt.f32.partialorder %v1431, %v1509
    %vm1516 = vcmp.gt.f32.partialorder %v1432, %v1510
    %vm1517 = vcmp.gt.f32.partialorder %v1433, %v1511
    %vm1518 = vcmp.gt.f32.partialorder %v1434, %v1512
    %vm1519 = vcmp.gt.f32.partialorder %v1435, %v1513
    %vm1520 = vmand %vm1448, %vm1514
    %vm1521 = vmand %vm1449, %vm1515
    %vm1522 = vmand %vm1450, %vm1516
    %vm1523 = vmand %vm1451, %vm1517
    %vm1524 = vmand %vm1452, %vm1518
    %vm1525 = vmand %vm1453, %vm1519
    %v1526 = vsel %vm1466, 1, 0
    %v1527 = vsel %vm1467, 1, 0
    %v1528 = vsel %vm1468, 1, 0
    %v1529 = vsel %vm1469, 1, 0
    %v1530 = vsel %vm1470, 1, 0
    %v1531 = vsel %vm1471, 1, 0
    %v1532 = vsel %vm1484, 1, 0
    %v1533 = vsel %vm1485, 1, 0
    %v1534 = vsel %vm1486, 1, 0
    %v1535 = vsel %vm1487, 1, 0
    %v1536 = vsel %vm1488, 1, 0
    %v1537 = vsel %vm1489, 1, 0
    %v1538 = vadd.s32 %v1526, %v1532
    %v1539 = vadd.s32 %v1527, %v1533
    %v1540 = vadd.s32 %v1528, %v1534
    %v1541 = vadd.s32 %v1529, %v1535
    %v1542 = vadd.s32 %v1530, %v1536
    %v1543 = vadd.s32 %v1531, %v1537
    %v1544 = vsel %vm1502, 1, 0
    %v1545 = vsel %vm1503, 1, 0
    %v1546 = vsel %vm1504, 1, 0
    %v1547 = vsel %vm1505, 1, 0
    %v1548 = vsel %vm1506, 1, 0
    %v1549 = vsel %vm1507, 1, 0
    %v1550 = vadd.s32 %v1538, %v1544
    %v1551 = vadd.s32 %v1539, %v1545
    %v1552 = vadd.s32 %v1540, %v1546
    %v1553 = vadd.s32 %v1541, %v1547
    %v1554 = vadd.s32 %v1542, %v1548
    %v1555 = vadd.s32 %v1543, %v1549
    %v1556 = vsel %vm1520, 1, 0
    %v1557 = vsel %vm1521, 1, 0
    %v1558 = vsel %vm1522, 1, 0
    %v1559 = vsel %vm1523, 1, 0
    %v1560 = vsel %vm1524, 1, 0
    %v1561 = vsel %vm1525, 1, 0
    %v1562 = vadd.s32 %v1550, %v1556
    %v1563 = vadd.s32 %v1551, %v1557
    %v1564 = vadd.s32 %v1552, %v1558
    %v1565 = vadd.s32 %v1553, %v1559
    %v1566 = vadd.s32 %v1554, %v1560
    %v1567 = vadd.s32 %v1555, %v1561
    %vm1568 = vcmp.ge.f32.partialorder %v1355, 0.0
    %vm1569 = vcmp.ge.f32.partialorder %v1356, 0.0
    %vm1570 = vcmp.ge.f32.partialorder %v1357, 0.0
    %vm1571 = vcmp.ge.f32.partialorder %v1358, 0.0
    %vm1572 = vcmp.ge.f32.partialorder %v1359, 0.0
    %vm1573 = vcmp.ge.f32.partialorder %v1360, 0.0
    %v1574 = vsub.s32 0, %v1562
    %v1575 = vsub.s32 0, %v1563
    %v1576 = vsub.s32 0, %v1564
    %v1577 = vsub.s32 0, %v1565
    %v1578 = vsub.s32 0, %v1566
    %v1579 = vsub.s32 0, %v1567
    %v1580 = vsel %vm1568, %v1562, %v1574
    %v1581 = vsel %vm1569, %v1563, %v1575
    %v1582 = vsel %vm1570, %v1564, %v1576
    %v1583 = vsel %vm1571, %v1565, %v1577
    %v1584 = vsel %vm1572, %v1566, %v1578
    %v1585 = vsel %vm1573, %v1567, %v1579
    %v1586 = vadd.s32 %v1580, 4
    %v1587 = vadd.s32 %v1581, 4
    %v1588 = vadd.s32 %v1582, 4
    %v1589 = vadd.s32 %v1583, 4
    %v1590 = vadd.s32 %v1584, 4
    %v1591 = vadd.s32 %v1585, 4
    %v1592 = vcvt.s32.f32 %v1586
    %v1593 = vcvt.s32.f32 %v1587
    %v1594 = vcvt.s32.f32 %v1588
    %v1595 = vcvt.s32.f32 %v1589
    %v1596 = vcvt.s32.f32 %v1590
    %v1597 = vcvt.s32.f32 %v1591
    %v1598 = vmul.f32 %v1592, 45.0
    %v1599 = vmul.f32 %v1593, 45.0
    %v1600 = vmul.f32 %v1594, 45.0
    %v1601 = vmul.f32 %v1595, 45.0
    %v1602 = vmul.f32 %v1596, 45.0
    %v1603 = vmul.f32 %v1597, 45.0
    %1610 = vrot.lane.b32.xlu0 %v1598, 1
    %v1611 = vpop.permute.xlu0 %1610
    %1612 = vrot.lane.b32.xlu0 %v1599, 1
    %v1613 = vpop.permute.xlu0 %1612
    %1614 = vrot.lane.b32.xlu0 %v1600, 1
    %v1615 = vpop.permute.xlu0 %1614
    %1616 = vrot.lane.b32.xlu0 %v1601, 1
    %v1617 = vpop.permute.xlu0 %1616
    %1618 = vrot.lane.b32.xlu0 %v1602, 1
    %v1619 = vpop.permute.xlu0 %1618
    %1620 = vrot.lane.b32.xlu0 %v1603, 1
    %v1621 = vpop.permute.xlu0 %1620
    %v1622 = vsel %vm1379, %v1611, %v1613
    %v1623 = vsel %vm1379, %v1615, %v1617
    %v1624 = vsel %vm1379, %v1619, %v1621
    %1628 = vst.msk [vmem:[#allocation9 - $0x7] sm:$0x80] %vm1386, %v1622
    %1629 = vst.msk [vmem:[#allocation9 + $0x1] sm:$0xff] %vm44, %v1623
    %1630 = vst.msk [vmem:[#allocation9 + $0x9] sm:$0x7f] %vm1389, %v1624
    %vm1631 = vcmp.eq.s32.totalorder %v1580, 4
    %vm1632 = vcmp.eq.s32.totalorder %v1581, 4
    %vm1633 = vcmp.eq.s32.totalorder %v1582, 4
    %vm1634 = vcmp.eq.s32.totalorder %v1583, 4
    %vm1635 = vcmp.eq.s32.totalorder %v1584, 4
    %vm1636 = vcmp.eq.s32.totalorder %v1585, 4
    %v1637 = vsel %vm1631, 0, %v1586
    %v1638 = vsel %vm1632, 0, %v1587
    %v1639 = vsel %vm1633, 0, %v1588
    %v1640 = vsel %vm1634, 0, %v1589
    %v1641 = vsel %vm1635, 0, %v1590
    %v1642 = vsel %vm1636, 0, %v1591
    %vm1643 = vcmp.lt.s32.totalorder %v1580, 0
    %vm1644 = vcmp.lt.s32.totalorder %v1581, 0
    %vm1645 = vcmp.lt.s32.totalorder %v1582, 0
    %vm1646 = vcmp.lt.s32.totalorder %v1583, 0
    %vm1647 = vcmp.lt.s32.totalorder %v1584, 0
    %vm1648 = vcmp.lt.s32.totalorder %v1585, 0
    %v1649 = vadd.s32 %v1580, 8
    %v1650 = vadd.s32 %v1581, 8
    %v1651 = vadd.s32 %v1582, 8
    %v1652 = vadd.s32 %v1583, 8
    %v1653 = vadd.s32 %v1584, 8
    %v1654 = vadd.s32 %v1585, 8
    %v1655 = vsel %vm1643, %v1649, %v1580
    %v1656 = vsel %vm1644, %v1650, %v1581
    %v1657 = vsel %vm1645, %v1651, %v1582
    %v1658 = vsel %vm1646, %v1652, %v1583
    %v1659 = vsel %vm1647, %v1653, %v1584
    %v1660 = vsel %vm1648, %v1654, %v1585
    %vm1661 = vcmask 1040384
    %v1662 = vrot.slane %v1331, 7
    %v1663 = vrot.slane %v1333, 7
    %v1664 = vsel %vm1661, %v1662, %v1663
    %v1665 = vrot.slane %v1332, 7
    %v1666 = vrot.slane %v1334, 7
    %v1667 = vsel %vm1661, %v1665, %v1666
    %v1668 = vrot.slane %v1335, 7
    %v1669 = vsel %vm1661, %v1663, %v1668
    %v1670 = vrot.slane %v1336, 7
    %v1671 = vsel %vm1661, %v1666, %v1670
    %1672 = vrot.lane.b32.xlu0 %v1664, 1
    %v1673 = vpop.permute.xlu0 %1672
    %1674 = vrot.lane.b32.xlu0 %v1667, 1
    %v1675 = vpop.permute.xlu0 %1674
    %1676 = vrot.lane.b32.xlu0 %v1669, 1
    %v1677 = vpop.permute.xlu0 %1676
    %1678 = vrot.lane.b32.xlu0 %v1671, 1
    %v1679 = vpop.permute.xlu0 %1678
    %v1680 = vsel %vm1379, %v1673, %v1675
    %v1681 = vsel %vm1379, %v1677, %v1679
    %1684 = vst.msk [vmem:[#allocation2 + $0x18] sm:$0xff] %vm44, %v1680
    %1685 = vst.msk [vmem:[#allocation2 + $0x28] sm:$0xff] %vm44, %v1681
    %v1686 = vld [vmem:[#allocation2 + $0x18] sm:$0xff]
    %v1687 = vld [vmem:[#allocation2 + $0x28] sm:$0xff]
    %vm1688 = vcmp.eq.s32.totalorder %v1637, 0
    %vm1689 = vcmp.eq.s32.totalorder %v1638, 0
    %vm1690 = vcmp.eq.s32.totalorder %v1639, 0
    %vm1691 = vcmp.eq.s32.totalorder %v1640, 0
    %vm1692 = vcmp.eq.s32.totalorder %v1641, 0
    %vm1693 = vcmp.eq.s32.totalorder %v1642, 0
    %v1696 = vrot.slane %v1686, 1
    %v1697 = vrot.slane %v1687, 1
    %v1698 = vsel %vm149, %v1696, %v1697
    %1699 = vrot.lane.b32.xlu0 %v1696, 126
    %v1700 = vpop.permute.xlu0 %1699
    %1701 = vrot.lane.b32.xlu0 %v1698, 126
    %v1702 = vpop.permute.xlu0 %1701
    %1703 = vrot.lane.b32.xlu0 %v1697, 126
    %v1704 = vpop.permute.xlu0 %1703
    %v1708 = vsel %vm1688, %v1700, 0.0
    %v1709 = vsel %vm1689, %v1700, 0.0
    %v1710 = vsel %vm1690, %v1702, 0.0
    %v1711 = vsel %vm1691, %v1702, 0.0
    %v1712 = vsel %vm1692, %v1704, 0.0
    %v1713 = vsel %vm1693, %v1704, 0.0
    %vm1714 = vcmp.eq.s32.totalorder %v1655, 0
    %vm1715 = vcmp.eq.s32.totalorder %v1656, 0
    %vm1716 = vcmp.eq.s32.totalorder %v1657, 0
    %vm1717 = vcmp.eq.s32.totalorder %v1658, 0
    %vm1718 = vcmp.eq.s32.totalorder %v1659, 0
    %vm1719 = vcmp.eq.s32.totalorder %v1660, 0
    %v1720 = vsel %vm1714, %v1700, 0.0
    %v1721 = vsel %vm1715, %v1700, 0.0
    %v1722 = vsel %vm1716, %v1702, 0.0
    %v1723 = vsel %vm1717, %v1702, 0.0
    %v1724 = vsel %vm1718, %v1704, 0.0
    %v1725 = vsel %vm1719, %v1704, 0.0
    %v1726 = vld [vmem:[#allocation2 + $0x18] sm:$0xfe]
    %v1727 = vld [vmem:[#allocation2 + $0x38] sm:$0x1]
    %vm1728 = vcmp.eq.s32.totalorder %v1637, 1
    %vm1729 = vcmp.eq.s32.totalorder %v1638, 1
    %vm1730 = vcmp.eq.s32.totalorder %v1639, 1
    %vm1731 = vcmp.eq.s32.totalorder %v1640, 1
    %vm1732 = vcmp.eq.s32.totalorder %v1641, 1
    %vm1733 = vcmp.eq.s32.totalorder %v1642, 1
    %v1736 = vrot.slane %v1726, 2
    %v1737 = vrot.slane %v1687, 2
    %v1738 = vsel %vm164, %v1736, %v1737
    %v1739 = vrot.slane %v1727, 2
    %v1740 = vsel %vm164, %v1737, %v1739
    %1741 = vrot.lane.b32.xlu0 %v1736, 126
    %v1742 = vpop.permute.xlu0 %1741
    %1743 = vrot.lane.b32.xlu0 %v1738, 126
    %v1744 = vpop.permute.xlu0 %1743
    %1745 = vrot.lane.b32.xlu0 %v1740, 126
    %v1746 = vpop.permute.xlu0 %1745
    %v1750 = vsel %vm1728, %v1742, %v1708
    %v1751 = vsel %vm1729, %v1742, %v1709
    %v1752 = vsel %vm1730, %v1744, %v1710
    %v1753 = vsel %vm1731, %v1744, %v1711
    %v1754 = vsel %vm1732, %v1746, %v1712
    %v1755 = vsel %vm1733, %v1746, %v1713
    %vm1756 = vcmp.eq.s32.totalorder %v1655, 1
    %vm1757 = vcmp.eq.s32.totalorder %v1656, 1
    %vm1758 = vcmp.eq.s32.totalorder %v1657, 1
    %vm1759 = vcmp.eq.s32.totalorder %v1658, 1
    %vm1760 = vcmp.eq.s32.totalorder %v1659, 1
    %vm1761 = vcmp.eq.s32.totalorder %v1660, 1
    %v1762 = vsel %vm1756, %v1742, %v1720
    %v1763 = vsel %vm1757, %v1742, %v1721
    %v1764 = vsel %vm1758, %v1744, %v1722
    %v1765 = vsel %vm1759, %v1744, %v1723
    %v1766 = vsel %vm1760, %v1746, %v1724
    %v1767 = vsel %vm1761, %v1746, %v1725
    %vm1768 = vcmp.eq.s32.totalorder %v1637, 2
    %vm1769 = vcmp.eq.s32.totalorder %v1638, 2
    %vm1770 = vcmp.eq.s32.totalorder %v1639, 2
    %vm1771 = vcmp.eq.s32.totalorder %v1640, 2
    %vm1772 = vcmp.eq.s32.totalorder %v1641, 2
    %vm1773 = vcmp.eq.s32.totalorder %v1642, 2
    %1774 = vrot.lane.b32.xlu0 %v1736, 127
    %v1775 = vpop.permute.xlu0 %1774
    %1776 = vrot.lane.b32.xlu0 %v1738, 127
    %v1777 = vpop.permute.xlu0 %1776
    %1778 = vrot.lane.b32.xlu0 %v1740, 127
    %v1779 = vpop.permute.xlu0 %1778
    %v1783 = vsel %vm1768, %v1775, %v1750
    %v1784 = vsel %vm1769, %v1775, %v1751
    %v1785 = vsel %vm1770, %v1777, %v1752
    %v1786 = vsel %vm1771, %v1777, %v1753
    %v1787 = vsel %vm1772, %v1779, %v1754
    %v1788 = vsel %vm1773, %v1779, %v1755
    %vm1789 = vcmp.eq.s32.totalorder %v1655, 2
    %vm1790 = vcmp.eq.s32.totalorder %v1656, 2
    %vm1791 = vcmp.eq.s32.totalorder %v1657, 2
    %vm1792 = vcmp.eq.s32.totalorder %v1658, 2
    %vm1793 = vcmp.eq.s32.totalorder %v1659, 2
    %vm1794 = vcmp.eq.s32.totalorder %v1660, 2
    %v1795 = vsel %vm1789, %v1775, %v1762
    %v1796 = vsel %vm1790, %v1775, %v1763
    %v1797 = vsel %vm1791, %v1777, %v1764
    %v1798 = vsel %vm1792, %v1777, %v1765
    %v1799 = vsel %vm1793, %v1779, %v1766
    %v1800 = vsel %vm1794, %v1779, %v1767
    %v1801 = vld [vmem:[#allocation2 + $0x10] sm:$0xfe]
    %v1802 = vld [vmem:[#allocation2 + $0x20] sm:$0xff]
    %v1803 = vld [vmem:[#allocation2 + $0x30] sm:$0x1]
    %vm1804 = vcmp.eq.s32.totalorder %v1637, 3
    %vm1805 = vcmp.eq.s32.totalorder %v1638, 3
    %vm1806 = vcmp.eq.s32.totalorder %v1639, 3
    %vm1807 = vcmp.eq.s32.totalorder %v1640, 3
    %vm1808 = vcmp.eq.s32.totalorder %v1641, 3
    %vm1809 = vcmp.eq.s32.totalorder %v1642, 3
    %v1813 = vrot.slane %v1801, 2
    %v1814 = vrot.slane %v1802, 2
    %v1815 = vsel %vm164, %v1813, %v1814
    %v1816 = vrot.slane %v1803, 2
    %v1817 = vsel %vm164, %v1814, %v1816
    %v1824 = vsel %vm1804, %v1813, %v1783
    %v1825 = vsel %vm1805, %v1736, %v1784
    %v1826 = vsel %vm1806, %v1815, %v1785
    %v1827 = vsel %vm1807, %v1738, %v1786
    %v1828 = vsel %vm1808, %v1817, %v1787
    %v1829 = vsel %vm1809, %v1740, %v1788
    %vm1830 = vcmp.eq.s32.totalorder %v1655, 3
    %vm1831 = vcmp.eq.s32.totalorder %v1656, 3
    %vm1832 = vcmp.eq.s32.totalorder %v1657, 3
    %vm1833 = vcmp.eq.s32.totalorder %v1658, 3
    %vm1834 = vcmp.eq.s32.totalorder %v1659, 3
    %vm1835 = vcmp.eq.s32.totalorder %v1660, 3
    %v1836 = vsel %vm1830, %v1813, %v1795
    %v1837 = vsel %vm1831, %v1736, %v1796
    %v1838 = vsel %vm1832, %v1815, %v1797
    %v1839 = vsel %vm1833, %v1738, %v1798
    %v1840 = vsel %vm1834, %v1817, %v1799
    %v1841 = vsel %vm1835, %v1740, %v1800
    %v1842 = vld [vmem:[#allocation2 + $0x10] sm:$0xff]
    %vm1843 = vcmp.eq.s32.totalorder %v1637, 4
    %vm1844 = vcmp.eq.s32.totalorder %v1638, 4
    %vm1845 = vcmp.eq.s32.totalorder %v1639, 4
    %vm1846 = vcmp.eq.s32.totalorder %v1640, 4
    %vm1847 = vcmp.eq.s32.totalorder %v1641, 4
    %vm1848 = vcmp.eq.s32.totalorder %v1642, 4
    %v1850 = vrot.slane %v1842, 1
    %v1851 = vrot.slane %v1802, 1
    %v1852 = vsel %vm149, %v1850, %v1851
    %v1859 = vsel %vm1843, %v1850, %v1824
    %v1860 = vsel %vm1844, %v1696, %v1825
    %v1861 = vsel %vm1845, %v1852, %v1826
    %v1862 = vsel %vm1846, %v1698, %v1827
    %v1863 = vsel %vm1847, %v1851, %v1828
    %v1864 = vsel %vm1848, %v1697, %v1829
    %vm1865 = vcmp.eq.s32.totalorder %v1655, 4
    %vm1866 = vcmp.eq.s32.totalorder %v1656, 4
    %vm1867 = vcmp.eq.s32.totalorder %v1657, 4
    %vm1868 = vcmp.eq.s32.totalorder %v1658, 4
    %vm1869 = vcmp.eq.s32.totalorder %v1659, 4
    %vm1870 = vcmp.eq.s32.totalorder %v1660, 4
    %v1871 = vsel %vm1865, %v1850, %v1836
    %v1872 = vsel %vm1866, %v1696, %v1837
    %v1873 = vsel %vm1867, %v1852, %v1838
    %v1874 = vsel %vm1868, %v1698, %v1839
    %v1875 = vsel %vm1869, %v1851, %v1840
    %v1876 = vsel %vm1870, %v1697, %v1841
    %v1877 = vld [vmem:[#allocation2] sm:$0x80]
    %v1878 = vld [vmem:[#allocation2 + $0x8] sm:$0x80]
    %v1879 = vld [vmem:[#allocation2 + $0x20] sm:$0x7f]
    %v1880 = vld [vmem:[#allocation2 + $0x28] sm:$0x7f]
    %vm1881 = vcmp.eq.s32.totalorder %v1637, 5
    %vm1882 = vcmp.eq.s32.totalorder %v1638, 5
    %vm1883 = vcmp.eq.s32.totalorder %v1639, 5
    %vm1884 = vcmp.eq.s32.totalorder %v1640, 5
    %vm1885 = vcmp.eq.s32.totalorder %v1641, 5
    %vm1886 = vcmp.eq.s32.totalorder %v1642, 5
    %v1887 = vsel %vm1881, %v1877, %v1859
    %v1888 = vsel %vm1882, %v1878, %v1860
    %v1889 = vsel %vm1883, %v1842, %v1861
    %v1890 = vsel %vm1884, %v1686, %v1862
    %v1891 = vsel %vm1885, %v1879, %v1863
    %v1892 = vsel %vm1886, %v1880, %v1864
    %vm1893 = vcmp.eq.s32.totalorder %v1655, 5
    %vm1894 = vcmp.eq.s32.totalorder %v1656, 5
    %vm1895 = vcmp.eq.s32.totalorder %v1657, 5
    %vm1896 = vcmp.eq.s32.totalorder %v1658, 5
    %vm1897 = vcmp.eq.s32.totalorder %v1659, 5
    %vm1898 = vcmp.eq.s32.totalorder %v1660, 5
    %v1899 = vsel %vm1893, %v1877, %v1871
    %v1900 = vsel %vm1894, %v1878, %v1872
    %v1901 = vsel %vm1895, %v1842, %v1873
    %v1902 = vsel %vm1896, %v1686, %v1874
    %v1903 = vsel %vm1897, %v1879, %v1875
    %v1904 = vsel %vm1898, %v1880, %v1876
    %vm1905 = vcmp.eq.s32.totalorder %v1637, 6
    %vm1906 = vcmp.eq.s32.totalorder %v1638, 6
    %vm1907 = vcmp.eq.s32.totalorder %v1639, 6
    %vm1908 = vcmp.eq.s32.totalorder %v1640, 6
    %vm1909 = vcmp.eq.s32.totalorder %v1641, 6
    %vm1910 = vcmp.eq.s32.totalorder %v1642, 6
    %1913 = vrot.lane.b32.xlu0 %v1878, 127
    %v1914 = vpop.permute.xlu0 %1913
    %1915 = vrot.lane.b32.xlu0 %v1686, 127
    %v1916 = vpop.permute.xlu0 %1915
    %1917 = vrot.lane.b32.xlu0 %v1880, 127
    %v1918 = vpop.permute.xlu0 %1917
    %v1922 = vsel %vm1905, %v1914, %v1887
    %v1923 = vsel %vm1906, %v1914, %v1888
    %v1924 = vsel %vm1907, %v1916, %v1889
    %v1925 = vsel %vm1908, %v1916, %v1890
    %v1926 = vsel %vm1909, %v1918, %v1891
    %v1927 = vsel %vm1910, %v1918, %v1892
    %vm1928 = vcmp.eq.s32.totalorder %v1655, 6
    %vm1929 = vcmp.eq.s32.totalorder %v1656, 6
    %vm1930 = vcmp.eq.s32.totalorder %v1657, 6
    %vm1931 = vcmp.eq.s32.totalorder %v1658, 6
    %vm1932 = vcmp.eq.s32.totalorder %v1659, 6
    %vm1933 = vcmp.eq.s32.totalorder %v1660, 6
    %v1934 = vsel %vm1928, %v1914, %v1899
    %v1935 = vsel %vm1929, %v1914, %v1900
    %v1936 = vsel %vm1930, %v1916, %v1901
    %v1937 = vsel %vm1931, %v1916, %v1902
    %v1938 = vsel %vm1932, %v1918, %v1903
    %v1939 = vsel %vm1933, %v1918, %v1904
    %vm1940 = vcmp.eq.s32.totalorder %v1637, 7
    %vm1941 = vcmp.eq.s32.totalorder %v1638, 7
    %vm1942 = vcmp.eq.s32.totalorder %v1639, 7
    %vm1943 = vcmp.eq.s32.totalorder %v1640, 7
    %vm1944 = vcmp.eq.s32.totalorder %v1641, 7
    %vm1945 = vcmp.eq.s32.totalorder %v1642, 7
    %1946 = vrot.lane.b32.xlu0 %v1878, 126
    %v1947 = vpop.permute.xlu0 %1946
    %1948 = vrot.lane.b32.xlu0 %v1686, 126
    %v1949 = vpop.permute.xlu0 %1948
    %1950 = vrot.lane.b32.xlu0 %v1880, 126
    %v1951 = vpop.permute.xlu0 %1950
    %v1955 = vsel %vm1940, %v1947, %v1922
    %v1956 = vsel %vm1941, %v1947, %v1923
    %v1957 = vsel %vm1942, %v1949, %v1924
    %v1958 = vsel %vm1943, %v1949, %v1925
    %v1959 = vsel %vm1944, %v1951, %v1926
    %v1960 = vsel %vm1945, %v1951, %v1927
    %vm1961 = vcmp.eq.s32.totalorder %v1655, 7
    %vm1962 = vcmp.eq.s32.totalorder %v1656, 7
    %vm1963 = vcmp.eq.s32.totalorder %v1657, 7
    %vm1964 = vcmp.eq.s32.totalorder %v1658, 7
    %vm1965 = vcmp.eq.s32.totalorder %v1659, 7
    %vm1966 = vcmp.eq.s32.totalorder %v1660, 7
    %v1967 = vsel %vm1961, %v1947, %v1934
    %v1968 = vsel %vm1962, %v1947, %v1935
    %v1969 = vsel %vm1963, %v1949, %v1936
    %v1970 = vsel %vm1964, %v1949, %v1937
    %v1971 = vsel %vm1965, %v1951, %v1938
    %v1972 = vsel %vm1966, %v1951, %v1939
    %v1973 = vsub.f32 %v1331, %v1955
    %v1974 = vsub.f32 %v1332, %v1956
    %v1975 = vsub.f32 %v1333, %v1957
    %v1976 = vsub.f32 %v1334, %v1958
    %v1977 = vsub.f32 %v1335, %v1959
    %v1978 = vsub.f32 %v1336, %v1960
    %v1979 = vsub.f32 %v1331, %v1967
    %v1980 = vsub.f32 %v1332, %v1968
    %v1981 = vsub.f32 %v1333, %v1969
    %v1982 = vsub.f32 %v1334, %v1970
    %v1983 = vsub.f32 %v1335, %v1971
    %v1984 = vsub.f32 %v1336, %v1972
    %v1985 = vmin.f32 %v1973, %v1979
    %v1986 = vmin.f32 %v1974, %v1980
    %v1987 = vmin.f32 %v1975, %v1981
    %v1988 = vmin.f32 %v1976, %v1982
    %v1989 = vmin.f32 %v1977, %v1983
    %v1990 = vmin.f32 %v1978, %v1984
    %vm1991 = vcmp.gt.f32.partialorder %v1985, 0.0
    %vm1992 = vcmp.gt.f32.partialorder %v1986, 0.0
    %vm1993 = vcmp.gt.f32.partialorder %v1987, 0.0
    %vm1994 = vcmp.gt.f32.partialorder %v1988, 0.0
    %vm1995 = vcmp.gt.f32.partialorder %v1989, 0.0
    %vm1996 = vcmp.gt.f32.partialorder %v1990, 0.0
    %v1997 = vsel %vm1991, %v1331, 0.0
    %v1998 = vsel %vm1992, %v1332, 0.0
    %v1999 = vsel %vm1993, %v1333, 0.0
    %v2000 = vsel %vm1994, %v1334, 0.0
    %v2001 = vsel %vm1995, %v1335, 0.0
    %v2002 = vsel %vm1996, %v1336, 0.0
    %2009 = vrot.lane.b32.xlu0 %v1997, 1
    %v2010 = vpop.permute.xlu0 %2009
    %2011 = vrot.lane.b32.xlu0 %v1998, 1
    %v2012 = vpop.permute.xlu0 %2011
    %2013 = vrot.lane.b32.xlu0 %v1999, 1
    %v2014 = vpop.permute.xlu0 %2013
    %2015 = vrot.lane.b32.xlu0 %v2000, 1
    %v2016 = vpop.permute.xlu0 %2015
    %2017 = vrot.lane.b32.xlu0 %v2001, 1
    %v2018 = vpop.permute.xlu0 %2017
    %2019 = vrot.lane.b32.xlu0 %v2002, 1
    %v2020 = vpop.permute.xlu0 %2019
    %v2021 = vsel %vm1379, %v2010, %v2012
    %v2022 = vsel %vm1379, %v2014, %v2016
    %v2023 = vsel %vm1379, %v2018, %v2020
    %2027 = vst.msk [vmem:[#allocation10 - $0x7] sm:$0x80] %vm1386, %v2021
    %2028 = vst.msk [vmem:[#allocation10 + $0x1] sm:$0xff] %vm44, %v2022
    %2029 = vst.msk [vmem:[#allocation10 + $0x9] sm:$0x7f] %vm1389, %v2023
    %vm2030 = vcmp.lt.f32.partialorder %v1997, 10.0
    %vm2031 = vcmp.lt.f32.partialorder %v1998, 10.0
    %vm2032 = vcmp.lt.f32.partialorder %v1999, 10.0
    %vm2033 = vcmp.lt.f32.partialorder %v2000, 10.0
    %vm2034 = vcmp.lt.f32.partialorder %v2001, 10.0
    %vm2035 = vcmp.lt.f32.partialorder %v2002, 10.0
    %v2036 = vsel %vm2030, 0.0, %v1997
    %v2037 = vsel %vm2031, 0.0, %v1998
    %v2038 = vsel %vm2032, 0.0, %v1999
    %v2039 = vsel %vm2033, 0.0, %v2000
    %v2040 = vsel %vm2034, 0.0, %v2001
    %v2041 = vsel %vm2035, 0.0, %v2002
    %2048 = vrot.lane.b32.xlu0 %v2036, 1
    %v2049 = vpop.permute.xlu0 %2048
    %2050 = vrot.lane.b32.xlu0 %v2037, 1
    %v2051 = vpop.permute.xlu0 %2050
    %2052 = vrot.lane.b32.xlu0 %v2038, 1
    %v2053 = vpop.permute.xlu0 %2052
    %2054 = vrot.lane.b32.xlu0 %v2039, 1
    %v2055 = vpop.permute.xlu0 %2054
    %2056 = vrot.lane.b32.xlu0 %v2040, 1
    %v2057 = vpop.permute.xlu0 %2056
    %2058 = vrot.lane.b32.xlu0 %v2041, 1
    %v2059 = vpop.permute.xlu0 %2058
    %v2060 = vsel %vm1379, %v2049, %v2051
    %v2061 = vsel %vm1379, %v2053, %v2055
    %v2062 = vsel %vm1379, %v2057, %v2059
    %2066 = vst.msk [vmem:[#allocation12 - $0x7] sm:$0x80] %vm1386, %v2060
    %2067 = vst.msk [vmem:[#allocation12 + $0x1] sm:$0xff] %vm44, %v2061
    %2068 = vst.msk [vmem:[#allocation12 + $0x9] sm:$0x7f] %vm1389, %v2062
    // Predicated region
    $region10: #{canny_net_forward.1} parent=1 // pred_check
      _
    $region11: #{canny_net_forward.1} parent=1 // pred_check_branch
      %2070 = sbr.rel (0) target = $region13
    $region12: #{canny_net_forward.1} parent=1 // pred_region
      %s2072 = ssub.s32 768, 768
      %2073 = vsyncadd [#allocation5], %s2072
      %s2074 = sshll.u32 [#allocation6], 4
      %s2075 = int_to_ptr.vmem [resolvable:$true] %s2074
      %2080 = dma.vmem_to_hbm [thread:$0]  %s2075, 768, %s1, [#allocation5], 128, 128, 8
    $region13: #{canny_net_forward.1} parent=1 // pred_fallthru
      _
    // Predicated region
    $region14: #{canny_net_forward.1} parent=1 // pred_check
      _
    $region15: #{canny_net_forward.1} parent=1 // pred_check_branch
      %2082 = sbr.rel (0) target = $region17
    $region16: #{canny_net_forward.1} parent=1 // pred_region
      %s2084 = ssub.s32 256, 256
      %2085 = vsyncadd [#allocation8], %s2084
      %s2086 = sshll.u32 [#allocation7], 4
      %s2087 = int_to_ptr.vmem [resolvable:$true] %s2086
      %2092 = dma.vmem_to_hbm [thread:$0]  %s2087, 256, %s2, [#allocation8], 128, 128, 8
    $region17: #{canny_net_forward.1} parent=1 // pred_fallthru
      _
    // Predicated region
    $region18: #{canny_net_forward.1} parent=1 // pred_check
      _
    $region19: #{canny_net_forward.1} parent=1 // pred_check_branch
      %2094 = sbr.rel (0) target = $region21
    $region20: #{canny_net_forward.1} parent=1 // pred_region
      %s2096 = ssub.s32 256, 256
      %2097 = vsyncadd [#allocation8], %s2096
      %s2098 = sshll.u32 [#allocation9], 4
      %s2099 = int_to_ptr.vmem [resolvable:$true] %s2098
      %2104 = dma.vmem_to_hbm [thread:$0]  %s2099, 256, %s3, [#allocation8], 128, 128, 8
    $region21: #{canny_net_forward.1} parent=1 // pred_fallthru
      _
    // Predicated region
    $region22: #{canny_net_forward.1} parent=1 // pred_check
      _
    $region23: #{canny_net_forward.1} parent=1 // pred_check_branch
      %2106 = sbr.rel (0) target = $region25
    $region24: #{canny_net_forward.1} parent=1 // pred_region
      %s2108 = ssub.s32 256, 256
      %2109 = vsyncadd [#allocation11], %s2108
      %s2110 = sshll.u32 [#allocation10], 4
      %s2111 = int_to_ptr.vmem [resolvable:$true] %s2110
      %2116 = dma.vmem_to_hbm [thread:$0]  %s2111, 256, %s4, [#allocation11], 128, 128, 8
    $region25: #{canny_net_forward.1} parent=1 // pred_fallthru
      _
    // Predicated region
    $region26: #{canny_net_forward.1} parent=1 // pred_check
      _
    $region27: #{canny_net_forward.1} parent=1 // pred_check_branch
      %2118 = sbr.rel (0) target = $region29
    $region28: #{canny_net_forward.1} parent=1 // pred_region
      %s2120 = ssub.s32 256, 256
      %2121 = vsyncadd [#allocation11], %s2120
      %s2122 = sshll.u32 [#allocation12], 4
      %s2123 = int_to_ptr.vmem [resolvable:$true] %s2122
      %2128 = dma.vmem_to_hbm [thread:$0]  %s2123, 256, %s5, [#allocation11], 128, 128, 8
    $region29: #{canny_net_forward.1} parent=1 // pred_fallthru
      _
    // Predicated region
    $region30: #{canny_net_forward.1} parent=1 // pred_check
      _
    $region31: #{canny_net_forward.1} parent=1 // pred_check_branch
      %2130 = sbr.rel (0) target = $region33
    $region32: #{canny_net_forward.1} parent=1 // pred_region
      %s2132 = ssub.s32 256, 256
      %2133 = vsyncadd [#allocation14], %s2132
      %s2134 = sshll.u32 [#allocation13], 4
      %s2135 = int_to_ptr.vmem [resolvable:$true] %s2134
      %2140 = dma.vmem_to_hbm [thread:$0]  %s2135, 256, %s6, [#allocation14], 128, 128, 8
    $region33: #{canny_net_forward.1} parent=1 // pred_fallthru
      _
    // Predicated region
    $region34: #{canny_net_forward.1} parent=1 // pred_check
      _
    $region35: #{canny_net_forward.1} parent=1 // pred_check_branch
      %2142 = sbr.rel (0) target = $region37
    $region36: #{canny_net_forward.1} parent=1 // pred_region
      %2143 = dma.done [#allocation5], 768
    $region37: #{canny_net_forward.1} parent=1 // pred_fallthru
      _
    // Predicated region
    $region38: #{canny_net_forward.1} parent=1 // pred_check
      _
    $region39: #{canny_net_forward.1} parent=1 // pred_check_branch
      %2145 = sbr.rel (0) target = $region41
    $region40: #{canny_net_forward.1} parent=1 // pred_region
      %2146 = dma.done [#allocation8], 256
    $region41: #{canny_net_forward.1} parent=1 // pred_fallthru
      _
    // Predicated region
    $region42: #{canny_net_forward.1} parent=1 // pred_check
      _
    $region43: #{canny_net_forward.1} parent=1 // pred_check_branch
      %2148 = sbr.rel (0) target = $region45
    $region44: #{canny_net_forward.1} parent=1 // pred_region
      %2149 = dma.done [#allocation8], 256
    $region45: #{canny_net_forward.1} parent=1 // pred_fallthru
      _
    // Predicated region
    $region46: #{canny_net_forward.1} parent=1 // pred_check
      _
    $region47: #{canny_net_forward.1} parent=1 // pred_check_branch
      %2151 = sbr.rel (0) target = $region49
    $region48: #{canny_net_forward.1} parent=1 // pred_region
      %2152 = dma.done [#allocation11], 256
    $region49: #{canny_net_forward.1} parent=1 // pred_fallthru
      _
    // Predicated region
    $region50: #{canny_net_forward.1} parent=1 // pred_check
      _
    $region51: #{canny_net_forward.1} parent=1 // pred_check_branch
      %2154 = sbr.rel (0) target = $region53
    $region52: #{canny_net_forward.1} parent=1 // pred_region
      %2155 = dma.done [#allocation11], 256
    $region53: #{canny_net_forward.1} parent=1 // pred_fallthru
      _
    // Predicated region
    $region54: #{canny_net_forward.1} parent=1 // pred_check
      _
    $region55: #{canny_net_forward.1} parent=1 // pred_check_branch
      %2157 = sbr.rel (0) target = $region57
    $region56: #{canny_net_forward.1} parent=1 // pred_region
      %2158 = dma.done [#allocation14], 256
    $region57: #{canny_net_forward.1} parent=1 // pred_fallthru
      _
    %2159 = vsyncpa [#allocation4], 1
    %2160 = vsyncpa [#allocation5], 1
    %2161 = vsyncpa [#allocation8], 1
    %2162 = vsyncpa [#allocation11], 1
    %2163 = vsyncpa [#allocation14], 1

</llo_original>
